<compile_context>
chip_gen: v7x
topology: tpu7x:2x2x1
jax: 0.10.0
libtpu: 0.0.40
codegen_flags: <defaults>
</compile_context>

<pallas_src>
import jax
import jax.numpy as jnp
from jax.experimental import pallas as pl
from jax.experimental.pallas import tpu as pltpu


def match_kernel(ppair_ref, qpair_ref, wa_ref, wb_ref, b_ref, o_ref):
    """One grid step = one batch row x one sequence tile.

    ppair/qpair : [2, 1, TS, H] f32   ({x1, x} stacked on a leading axis)
    wa          : [H, H]        bf16  (linear21 weight half for the diff term, transposed)
    wb          : [H, H]        bf16  (linear21 weight half for the prod term, transposed)
    b           : [1, H]        f32   (linear21 bias)
    o           : [1, 1, H]     f32   (running max for this batch row; resident over s)
    """
    s = pl.program_id(1)
    n_s = pl.num_programs(1)

    p1 = ppair_ref[0, 0]         # [TS, H] f32
    p = ppair_ref[1, 0]
    q1 = qpair_ref[0, 0]
    q = qpair_ref[1, 0]
    wa = wa_ref[...]             # [H, H] bf16
    wb = wb_ref[...]
    b = b_ref[...]               # [1, H] f32

    ts = p1.shape[0]

    # Row-stack p-path and q-path (sublane-axis concat: no cross-lane movement).
    # Elementwise math in f32.
    diff = jnp.concatenate([p1 - p, q1 - q], axis=0)   # [2*TS, H]
    prod = jnp.concatenate([p1 * p, q1 * q], axis=0)   # [2*TS, H]

    # Layer 1 (split-K over the lane concat): bf16 MXU inputs, f32 accumulate.
    m = jnp.maximum(
        jnp.dot(diff.astype(jnp.bfloat16), wa, preferred_element_type=jnp.float32)
        + jnp.dot(prod.astype(jnp.bfloat16), wb, preferred_element_type=jnp.float32)
        + b,
        0.0)                                           # [2*TS, H] f32

    m_bf = m.astype(jnp.bfloat16)
    m1 = m_bf[:ts]                                     # static sublane slices
    m2 = m_bf[ts:]

    # Layer 2 WITHOUT the bias (bias hoisted past the max).
    hm = (jnp.dot(m1, wa, preferred_element_type=jnp.float32)
          + jnp.dot(m2, wb, preferred_element_type=jnp.float32))   # [TS, H]

    tile_max = jnp.max(hm, axis=0, keepdims=True)      # [1, H]

    # Running max across the sequence axis, held in the resident output block.
    @pl.when(s == 0)
    def _():
        o_ref[0] = tile_max

    @pl.when(s != 0)
    def _():
        o_ref[0] = jnp.maximum(o_ref[0], tile_max)

    # Finalize: add the hoisted bias once per batch row.
    @pl.when(s == n_s - 1)
    def _():
        o_ref[0] = o_ref[0] + b


def prepare_params(w21, b21):
    """Split, transpose and bf16-cast linear21 params ONCE, outside the hot path."""
    H = w21.shape[0]
    wa = jnp.asarray(w21[:, :H]).T.astype(jnp.bfloat16)   # [H, H] acts on (x1 - x)
    wb = jnp.asarray(w21[:, H:]).T.astype(jnp.bfloat16)   # [H, H] acts on (x1 * x)
    b2 = jnp.asarray(b21, jnp.float32).reshape(1, H)
    return wa, wb, b2


def match_forward(p1, p, q1, q, wa, wb, b2, *, seq_tile=None,
                  vmem_limit_bytes=64 * 1024 * 1024):
    """p1/p/q1/q: [B, S, H] f32; wa/wb/b2 from prepare_params. Returns [B, H].

    seq_tile: rows per grid step (None => whole sequence). For BERT-size shapes
    pick a multiple of 256 (128 on v5e) that keeps the live set within VMEM
    (e.g. ts~256 at H=1024 on v7x; 512-1024 on v6e/v5e).
    """
    B, S, H = p1.shape
    ts = S if seq_tile is None else seq_tile
    assert S % ts == 0, "sequence length must be divisible by seq_tile"
    n_s = S // ts

    # Stack {x1, x} pairs: halves the per-step DMA descriptor count.
    p_pair = jnp.stack([p1, p], axis=0)    # [2, B, S, H]
    q_pair = jnp.stack([q1, q], axis=0)

    def run(single_buffer_weights):
        pair_spec = pl.BlockSpec((2, 1, ts, H), lambda i, s: (0, i, s, 0))
        if single_buffer_weights:
            # Constant-index blocks: one buffer is enough (no double-buffer waste).
            wsp = pl.BlockSpec((H, H), lambda i, s: (0, 0),
                               pipeline_mode=pl.Buffered(1))
            bsp = pl.BlockSpec((1, H), lambda i, s: (0, 0),
                               pipeline_mode=pl.Buffered(1))
        else:
            wsp = pl.BlockSpec((H, H), lambda i, s: (0, 0))
            bsp = pl.BlockSpec((1, H), lambda i, s: (0, 0))

        return pl.pallas_call(
            match_kernel,
            out_shape=jax.ShapeDtypeStruct((B, 1, H), jnp.float32),
            grid=(B, n_s),
            in_specs=[pair_spec, pair_spec, wsp, wsp, bsp],
            out_specs=pl.BlockSpec((1, 1, H), lambda i, s: (i, 0, 0)),
            compiler_params=pltpu.CompilerParams(
                dimension_semantics=("parallel", "arbitrary"),
                vmem_limit_bytes=vmem_limit_bytes),
        )(p_pair, q_pair, wa, wb, b2)

    try:
        out3 = run(True)
    except Exception:
        # Fallback for JAX versions where Buffered(1) on grid-pipelined inputs
        # is rejected; identical math, just default double-buffering.
        out3 = run(False)
    return out3.reshape(B, H)


def match_reference(p1, p, q1, q, w21, b21):
    """Pure-JAX f32 reference mirroring the PyTorch module."""
    def lin21(x):
        return x @ w21.T + b21
    con1 = jnp.concatenate([p1 - p, p1 * p], axis=2)
    con2 = jnp.concatenate([q1 - q, q1 * q], axis=2)
    m1 = jax.nn.relu(lin21(con1))
    m2 = jax.nn.relu(lin21(con2))
    hm = lin21(jnp.concatenate([m1, m2], axis=2))
    return jnp.max(hm, axis=1)


if __name__ == "__main__":
    B, S, H = 2, 8, 32          # batch, seq_len, hidden_size

    key = jax.random.PRNGKey(0)
    keys = jax.random.split(key, 6)

    # Forward-pass inputs.
    p1 = jax.random.normal(keys[0], (B, S, H), jnp.float32)
    p = jax.random.normal(keys[1], (B, S, H), jnp.float32)
    q1 = jax.random.normal(keys[2], (B, S, H), jnp.float32)
    q = jax.random.normal(keys[3], (B, S, H), jnp.float32)
    seq_len = S  # carried in the PyTorch input tuple but unused by forward()

    # linear21: [H, 2H] weight, [H] bias (PyTorch layout).
    w21 = jax.random.normal(keys[4], (H, 2 * H), jnp.float32) * 0.05
    b21 = jax.random.normal(keys[5], (H,), jnp.float32) * 0.05

    # One-time parameter preparation (outside the hot path).
    wa, wb, b2 = prepare_params(w21, b21)
    wa, wb, b2 = jax.block_until_ready((wa, wb, b2))

    out = match_forward(p1, p, q1, q, wa, wb, b2)
    out = jax.block_until_ready(out)

    ref = match_reference(p1, p, q1, q, w21, b21)
    assert out.shape == (B, H)
    # bf16 MXU inputs => looser tolerance vs the f32 reference.
    assert jnp.allclose(out, ref, atol=5e-2, rtol=5e-2), (
        "Pallas output mismatch vs JAX reference")

    print("KERNEL_OK")
</pallas_src>

<mosaic_0001>
module attributes {stable_mosaic.version = 11 : i64} {
  func.func @match_kernel(%arg0: i32, %arg1: i32, %arg2: memref<2x1x8x32xf32, #tpu.memory_space<vmem>>, %arg3: memref<2x1x8x32xf32, #tpu.memory_space<vmem>>, %arg4: memref<32x32xbf16, #tpu.memory_space<vmem>>, %arg5: memref<32x32xbf16, #tpu.memory_space<vmem>>, %arg6: memref<1x32xf32, #tpu.memory_space<vmem>>, %arg7: memref<1x1x32xf32, #tpu.memory_space<vmem>>) attributes {dimension_semantics = [#tpu.dimension_semantics<parallel>, #tpu.dimension_semantics<arbitrary>], iteration_bounds = array<i64: 2, 1>, scalar_prefetch = 0 : i64, scratch_operands = 0 : i64, tpu.core_type = #tpu.core_type<tc>, window_params = [{transform_indices = @transform_0, window_bounds = array<i64: 2, 1, 8, 32>}, {transform_indices = @transform_1, window_bounds = array<i64: 2, 1, 8, 32>}, {pipeline_mode = #tpu.pipeline_mode<synchronous>, transform_indices = @transform_2, window_bounds = array<i64: 32, 32>}, {pipeline_mode = #tpu.pipeline_mode<synchronous>, transform_indices = @transform_3, window_bounds = array<i64: 32, 32>}, {pipeline_mode = #tpu.pipeline_mode<synchronous>, transform_indices = @transform_4, window_bounds = array<i64: 1, 32>}, {transform_indices = @transform_5, window_bounds = array<i64: 1, 1, 32>}]} {
    %c0 = arith.constant 0 : index
    %c0_0 = arith.constant 0 : index
    %c0_1 = arith.constant 0 : index
    %c0_2 = arith.constant 0 : index
    %0 = vector.load %arg2[%c0, %c0_0, %c0_1, %c0_2] : memref<2x1x8x32xf32, #tpu.memory_space<vmem>>, vector<1x1x8x32xf32>
    %1 = vector.shape_cast %0 : vector<1x1x8x32xf32> to vector<8x32xf32>
    %c1 = arith.constant 1 : index
    %c0_3 = arith.constant 0 : index
    %c0_4 = arith.constant 0 : index
    %c0_5 = arith.constant 0 : index
    %2 = vector.load %arg2[%c1, %c0_3, %c0_4, %c0_5] : memref<2x1x8x32xf32, #tpu.memory_space<vmem>>, vector<1x1x8x32xf32>
    %3 = vector.shape_cast %2 : vector<1x1x8x32xf32> to vector<8x32xf32>
    %c0_6 = arith.constant 0 : index
    %c0_7 = arith.constant 0 : index
    %c0_8 = arith.constant 0 : index
    %c0_9 = arith.constant 0 : index
    %4 = vector.load %arg3[%c0_6, %c0_7, %c0_8, %c0_9] : memref<2x1x8x32xf32, #tpu.memory_space<vmem>>, vector<1x1x8x32xf32>
    %5 = vector.shape_cast %4 : vector<1x1x8x32xf32> to vector<8x32xf32>
    %c1_10 = arith.constant 1 : index
    %c0_11 = arith.constant 0 : index
    %c0_12 = arith.constant 0 : index
    %c0_13 = arith.constant 0 : index
    %6 = vector.load %arg3[%c1_10, %c0_11, %c0_12, %c0_13] : memref<2x1x8x32xf32, #tpu.memory_space<vmem>>, vector<1x1x8x32xf32>
    %7 = vector.shape_cast %6 : vector<1x1x8x32xf32> to vector<8x32xf32>
    %c0_14 = arith.constant 0 : index
    %c0_15 = arith.constant 0 : index
    %8 = vector.load %arg4[%c0_14, %c0_15] : memref<32x32xbf16, #tpu.memory_space<vmem>>, vector<32x32xbf16>
    %c0_16 = arith.constant 0 : index
    %c0_17 = arith.constant 0 : index
    %9 = vector.load %arg5[%c0_16, %c0_17] : memref<32x32xbf16, #tpu.memory_space<vmem>>, vector<32x32xbf16>
    %c0_18 = arith.constant 0 : index
    %c0_19 = arith.constant 0 : index
    %10 = vector.load %arg6[%c0_18, %c0_19] : memref<1x32xf32, #tpu.memory_space<vmem>>, vector<1x32xf32>
    %11 = arith.subf %1, %3 : vector<8x32xf32>
    %12 = arith.subf %5, %7 : vector<8x32xf32>
    %13 = tpu.concatenate %11, %12 in 0 : vector<8x32xf32>, vector<8x32xf32> -> vector<16x32xf32>
    %14 = arith.mulf %1, %3 : vector<8x32xf32>
    %15 = arith.mulf %5, %7 : vector<8x32xf32>
    %16 = tpu.concatenate %14, %15 in 0 : vector<8x32xf32>, vector<8x32xf32> -> vector<16x32xf32>
    %17 = arith.truncf %13 : vector<16x32xf32> to vector<16x32xbf16>
    %cst = arith.constant dense<0.000000e+00> : vector<16x32xf32>
    %18 = tpu.matmul %17, %8, %cst {dimension_numbers = #tpu.dot_dimension_numbers<[1], [0], [0], [1], [0, 0, 1, 1], [], []>} : vector<16x32xbf16>, vector<32x32xbf16>, vector<16x32xf32> -> vector<16x32xf32>
    %19 = arith.truncf %16 : vector<16x32xf32> to vector<16x32xbf16>
    %cst_20 = arith.constant dense<0.000000e+00> : vector<16x32xf32>
    %20 = tpu.matmul %19, %9, %cst_20 {dimension_numbers = #tpu.dot_dimension_numbers<[1], [0], [0], [1], [0, 0, 1, 1], [], []>} : vector<16x32xbf16>, vector<32x32xbf16>, vector<16x32xf32> -> vector<16x32xf32>
    %21 = arith.addf %18, %20 : vector<16x32xf32>
    %22 = vector.broadcast %10 : vector<1x32xf32> to vector<16x32xf32>
    %23 = arith.addf %21, %22 : vector<16x32xf32>
    %cst_21 = arith.constant 0.000000e+00 : f32
    %24 = vector.broadcast %cst_21 : f32 to vector<16x32xf32>
    %25 = arith.maximumf %23, %24 : vector<16x32xf32>
    %26 = arith.truncf %25 : vector<16x32xf32> to vector<16x32xbf16>
    %27 = vector.extract_strided_slice %26 {offsets = [0, 0], sizes = [8, 32], strides = [1, 1]} : vector<16x32xbf16> to vector<8x32xbf16>
    %28 = vector.extract_strided_slice %26 {offsets = [8, 0], sizes = [8, 32], strides = [1, 1]} : vector<16x32xbf16> to vector<8x32xbf16>
    %cst_22 = arith.constant dense<0.000000e+00> : vector<8x32xf32>
    %29 = tpu.matmul %27, %8, %cst_22 {dimension_numbers = #tpu.dot_dimension_numbers<[1], [0], [0], [1], [0, 0, 1, 1], [], []>} : vector<8x32xbf16>, vector<32x32xbf16>, vector<8x32xf32> -> vector<8x32xf32>
    %cst_23 = arith.constant dense<0.000000e+00> : vector<8x32xf32>
    %30 = tpu.matmul %28, %9, %cst_23 {dimension_numbers = #tpu.dot_dimension_numbers<[1], [0], [0], [1], [0, 0, 1, 1], [], []>} : vector<8x32xbf16>, vector<32x32xbf16>, vector<8x32xf32> -> vector<8x32xf32>
    %31 = arith.addf %29, %30 : vector<8x32xf32>
    %cst_24 = arith.constant dense<0xFF800000> : vector<32xf32>
    %32 = vector.multi_reduction <maximumf>, %31, %cst_24 [0] : vector<8x32xf32> to vector<32xf32>
    %33 = vector.shape_cast %32 : vector<32xf32> to vector<1x32xf32>
    %c0_i32 = arith.constant 0 : i32
    %34 = arith.cmpi eq, %arg1, %c0_i32 : i32
    %35 = arith.extui %34 : i1 to i32
    %c0_i32_25 = arith.constant 0 : i32
    %36 = arith.cmpi ne, %35, %c0_i32_25 : i32
    scf.if %36 {
      %c0_30 = arith.constant 0 : index
      %c0_31 = arith.constant 0 : index
      %c0_32 = arith.constant 0 : index
      %43 = vector.load %arg7[%c0_30, %c0_31, %c0_32] : memref<1x1x32xf32, #tpu.memory_space<vmem>>, vector<1x1x32xf32>
      %44 = vector.shape_cast %43 : vector<1x1x32xf32> to vector<1x32xf32>
      %45 = vector.shape_cast %33 : vector<1x32xf32> to vector<1x1x32xf32>
      tpu.vector_store %arg7[%c0_30, %c0_31, %c0_32], %45 {strides = array<i32>} : memref<1x1x32xf32, #tpu.memory_space<vmem>>, vector<1x1x32xf32>,
    } else {
    }
    %c0_i32_26 = arith.constant 0 : i32
    %37 = arith.cmpi ne, %arg1, %c0_i32_26 : i32
    %38 = arith.extui %37 : i1 to i32
    %c0_i32_27 = arith.constant 0 : i32
    %39 = arith.cmpi ne, %38, %c0_i32_27 : i32
    scf.if %39 {
      %c0_30 = arith.constant 0 : index
      %c0_31 = arith.constant 0 : index
      %c0_32 = arith.constant 0 : index
      %43 = vector.load %arg7[%c0_30, %c0_31, %c0_32] : memref<1x1x32xf32, #tpu.memory_space<vmem>>, vector<1x1x32xf32>
      %44 = vector.shape_cast %43 : vector<1x1x32xf32> to vector<1x32xf32>
      %45 = arith.maximumf %44, %33 : vector<1x32xf32>
      %c0_33 = arith.constant 0 : index
      %c0_34 = arith.constant 0 : index
      %c0_35 = arith.constant 0 : index
      %46 = vector.load %arg7[%c0_33, %c0_34, %c0_35] : memref<1x1x32xf32, #tpu.memory_space<vmem>>, vector<1x1x32xf32>
      %47 = vector.shape_cast %46 : vector<1x1x32xf32> to vector<1x32xf32>
      %48 = vector.shape_cast %45 : vector<1x32xf32> to vector<1x1x32xf32>
      tpu.vector_store %arg7[%c0_33, %c0_34, %c0_35], %48 {strides = array<i32>} : memref<1x1x32xf32, #tpu.memory_space<vmem>>, vector<1x1x32xf32>,
    } else {
    }
    %c0_i32_28 = arith.constant 0 : i32
    %40 = arith.cmpi eq, %arg1, %c0_i32_28 : i32
    %41 = arith.extui %40 : i1 to i32
    %c0_i32_29 = arith.constant 0 : i32
    %42 = arith.cmpi ne, %41, %c0_i32_29 : i32
    scf.if %42 {
      %c0_30 = arith.constant 0 : index
      %c0_31 = arith.constant 0 : index
      %c0_32 = arith.constant 0 : index
      %43 = vector.load %arg7[%c0_30, %c0_31, %c0_32] : memref<1x1x32xf32, #tpu.memory_space<vmem>>, vector<1x1x32xf32>
      %44 = vector.shape_cast %43 : vector<1x1x32xf32> to vector<1x32xf32>
      %45 = arith.addf %44, %10 : vector<1x32xf32>
      %c0_33 = arith.constant 0 : index
      %c0_34 = arith.constant 0 : index
      %c0_35 = arith.constant 0 : index
      %46 = vector.load %arg7[%c0_33, %c0_34, %c0_35] : memref<1x1x32xf32, #tpu.memory_space<vmem>>, vector<1x1x32xf32>
      %47 = vector.shape_cast %46 : vector<1x1x32xf32> to vector<1x32xf32>
      %48 = vector.shape_cast %45 : vector<1x32xf32> to vector<1x1x32xf32>
      tpu.vector_store %arg7[%c0_33, %c0_34, %c0_35], %48 {strides = array<i32>} : memref<1x1x32xf32, #tpu.memory_space<vmem>>, vector<1x1x32xf32>,
    } else {
    }
    return
  }
  func.func @transform_0(%arg0: i32, %arg1: i32) -> (i32, i32, i32, i32) {
    %c0_i32 = arith.constant 0 : i32
    %c0_i32_0 = arith.constant 0 : i32
    %c0_i32_1 = arith.constant 0 : i32
    return %c0_i32, %arg0, %arg1, %c0_i32_0 : i32, i32, i32, i32
  }
  func.func @transform_1(%arg0: i32, %arg1: i32) -> (i32, i32, i32, i32) {
    %c0_i32 = arith.constant 0 : i32
    %c0_i32_0 = arith.constant 0 : i32
    %c0_i32_1 = arith.constant 0 : i32
    return %c0_i32, %arg0, %arg1, %c0_i32_0 : i32, i32, i32, i32
  }
  func.func @transform_2(%arg0: i32, %arg1: i32) -> (i32, i32) {
    %c0_i32 = arith.constant 0 : i32
    %c0_i32_0 = arith.constant 0 : i32
    %c0_i32_1 = arith.constant 0 : i32
    return %c0_i32, %c0_i32_0 : i32, i32
  }
  func.func @transform_3(%arg0: i32, %arg1: i32) -> (i32, i32) {
    %c0_i32 = arith.constant 0 : i32
    %c0_i32_0 = arith.constant 0 : i32
    %c0_i32_1 = arith.constant 0 : i32
    return %c0_i32, %c0_i32_0 : i32, i32
  }
  func.func @transform_4(%arg0: i32, %arg1: i32) -> (i32, i32) {
    %c0_i32 = arith.constant 0 : i32
    %c0_i32_0 = arith.constant 0 : i32
    %c0_i32_1 = arith.constant 0 : i32
    return %c0_i32, %c0_i32_0 : i32, i32
  }
  func.func @transform_5(%arg0: i32, %arg1: i32) -> (i32, i32, i32) {
    %c0_i32 = arith.constant 0 : i32
    %c0_i32_0 = arith.constant 0 : i32
    %c0_i32_1 = arith.constant 0 : i32
    return %arg0, %c0_i32, %c0_i32_0 : i32, i32, i32
  }
}

module attributes {stable_mosaic.version = 11 : i64} {
  func.func @match_kernel(%arg0: i32, %arg1: i32, %arg2: memref<2x1x8x32xf32, #tpu.memory_space<vmem>>, %arg3: memref<2x1x8x32xf32, #tpu.memory_space<vmem>>, %arg4: memref<32x32xbf16, #tpu.memory_space<vmem>>, %arg5: memref<32x32xbf16, #tpu.memory_space<vmem>>, %arg6: memref<1x32xf32, #tpu.memory_space<vmem>>, %arg7: memref<1x1x32xf32, #tpu.memory_space<vmem>>) attributes {dimension_semantics = [#tpu.dimension_semantics<parallel>, #tpu.dimension_semantics<arbitrary>], iteration_bounds = array<i64: 2, 1>, scalar_prefetch = 0 : i64, scratch_operands = 0 : i64, tpu.core_type = #tpu.core_type<tc>, window_params = [{transform_indices = @transform_0, window_bounds = array<i64: 2, 1, 8, 32>}, {transform_indices = @transform_1, window_bounds = array<i64: 2, 1, 8, 32>}, {pipeline_mode = #tpu.pipeline_mode<synchronous>, transform_indices = @transform_2, window_bounds = array<i64: 32, 32>}, {pipeline_mode = #tpu.pipeline_mode<synchronous>, transform_indices = @transform_3, window_bounds = array<i64: 32, 32>}, {pipeline_mode = #tpu.pipeline_mode<synchronous>, transform_indices = @transform_4, window_bounds = array<i64: 1, 32>}, {transform_indices = @transform_5, window_bounds = array<i64: 1, 1, 32>}]} {
    %c0 = arith.constant 0 : index
    %c0_0 = arith.constant 0 : index
    %c0_1 = arith.constant 0 : index
    %c0_2 = arith.constant 0 : index
    %0 = vector.load %arg2[%c0, %c0_0, %c0_1, %c0_2] : memref<2x1x8x32xf32, #tpu.memory_space<vmem>>, vector<1x1x8x32xf32>
    %1 = vector.shape_cast %0 : vector<1x1x8x32xf32> to vector<8x32xf32>
    %c1 = arith.constant 1 : index
    %c0_3 = arith.constant 0 : index
    %c0_4 = arith.constant 0 : index
    %c0_5 = arith.constant 0 : index
    %2 = vector.load %arg2[%c1, %c0_3, %c0_4, %c0_5] : memref<2x1x8x32xf32, #tpu.memory_space<vmem>>, vector<1x1x8x32xf32>
    %3 = vector.shape_cast %2 : vector<1x1x8x32xf32> to vector<8x32xf32>
    %c0_6 = arith.constant 0 : index
    %c0_7 = arith.constant 0 : index
    %c0_8 = arith.constant 0 : index
    %c0_9 = arith.constant 0 : index
    %4 = vector.load %arg3[%c0_6, %c0_7, %c0_8, %c0_9] : memref<2x1x8x32xf32, #tpu.memory_space<vmem>>, vector<1x1x8x32xf32>
    %5 = vector.shape_cast %4 : vector<1x1x8x32xf32> to vector<8x32xf32>
    %c1_10 = arith.constant 1 : index
    %c0_11 = arith.constant 0 : index
    %c0_12 = arith.constant 0 : index
    %c0_13 = arith.constant 0 : index
    %6 = vector.load %arg3[%c1_10, %c0_11, %c0_12, %c0_13] : memref<2x1x8x32xf32, #tpu.memory_space<vmem>>, vector<1x1x8x32xf32>
    %7 = vector.shape_cast %6 : vector<1x1x8x32xf32> to vector<8x32xf32>
    %c0_14 = arith.constant 0 : index
    %c0_15 = arith.constant 0 : index
    %8 = vector.load %arg4[%c0_14, %c0_15] : memref<32x32xbf16, #tpu.memory_space<vmem>>, vector<32x32xbf16>
    %c0_16 = arith.constant 0 : index
    %c0_17 = arith.constant 0 : index
    %9 = vector.load %arg5[%c0_16, %c0_17] : memref<32x32xbf16, #tpu.memory_space<vmem>>, vector<32x32xbf16>
    %c0_18 = arith.constant 0 : index
    %c0_19 = arith.constant 0 : index
    %10 = vector.load %arg6[%c0_18, %c0_19] : memref<1x32xf32, #tpu.memory_space<vmem>>, vector<1x32xf32>
    %11 = arith.subf %1, %3 : vector<8x32xf32>
    %12 = arith.subf %5, %7 : vector<8x32xf32>
    %13 = tpu.concatenate %11, %12 in 0 : vector<8x32xf32>, vector<8x32xf32> -> vector<16x32xf32>
    %14 = arith.mulf %1, %3 : vector<8x32xf32>
    %15 = arith.mulf %5, %7 : vector<8x32xf32>
    %16 = tpu.concatenate %14, %15 in 0 : vector<8x32xf32>, vector<8x32xf32> -> vector<16x32xf32>
    %17 = arith.truncf %13 : vector<16x32xf32> to vector<16x32xbf16>
    %cst = arith.constant dense<0.000000e+00> : vector<16x32xf32>
    %18 = tpu.matmul %17, %8, %cst {dimension_numbers = #tpu.dot_dimension_numbers<[1], [0], [0], [1], [0, 0, 1, 1], [], []>} : vector<16x32xbf16>, vector<32x32xbf16>, vector<16x32xf32> -> vector<16x32xf32>
    %19 = arith.truncf %16 : vector<16x32xf32> to vector<16x32xbf16>
    %cst_20 = arith.constant dense<0.000000e+00> : vector<16x32xf32>
    %20 = tpu.matmul %19, %9, %cst_20 {dimension_numbers = #tpu.dot_dimension_numbers<[1], [0], [0], [1], [0, 0, 1, 1], [], []>} : vector<16x32xbf16>, vector<32x32xbf16>, vector<16x32xf32> -> vector<16x32xf32>
    %21 = arith.addf %18, %20 : vector<16x32xf32>
    %22 = vector.broadcast %10 : vector<1x32xf32> to vector<16x32xf32>
    %23 = arith.addf %21, %22 : vector<16x32xf32>
    %cst_21 = arith.constant 0.000000e+00 : f32
    %24 = vector.broadcast %cst_21 : f32 to vector<16x32xf32>
    %25 = arith.maximumf %23, %24 : vector<16x32xf32>
    %26 = arith.truncf %25 : vector<16x32xf32> to vector<16x32xbf16>
    %27 = vector.extract_strided_slice %26 {offsets = [0, 0], sizes = [8, 32], strides = [1, 1]} : vector<16x32xbf16> to vector<8x32xbf16>
    %28 = vector.extract_strided_slice %26 {offsets = [8, 0], sizes = [8, 32], strides = [1, 1]} : vector<16x32xbf16> to vector<8x32xbf16>
    %cst_22 = arith.constant dense<0.000000e+00> : vector<8x32xf32>
    %29 = tpu.matmul %27, %8, %cst_22 {dimension_numbers = #tpu.dot_dimension_numbers<[1], [0], [0], [1], [0, 0, 1, 1], [], []>} : vector<8x32xbf16>, vector<32x32xbf16>, vector<8x32xf32> -> vector<8x32xf32>
    %cst_23 = arith.constant dense<0.000000e+00> : vector<8x32xf32>
    %30 = tpu.matmul %28, %9, %cst_23 {dimension_numbers = #tpu.dot_dimension_numbers<[1], [0], [0], [1], [0, 0, 1, 1], [], []>} : vector<8x32xbf16>, vector<32x32xbf16>, vector<8x32xf32> -> vector<8x32xf32>
    %31 = arith.addf %29, %30 : vector<8x32xf32>
    %cst_24 = arith.constant dense<0xFF800000> : vector<32xf32>
    %32 = vector.multi_reduction <maximumf>, %31, %cst_24 [0] : vector<8x32xf32> to vector<32xf32>
    %33 = vector.shape_cast %32 : vector<32xf32> to vector<1x32xf32>
    %c0_i32 = arith.constant 0 : i32
    %34 = arith.cmpi eq, %arg1, %c0_i32 : i32
    %35 = arith.extui %34 : i1 to i32
    %c0_i32_25 = arith.constant 0 : i32
    %36 = arith.cmpi ne, %35, %c0_i32_25 : i32
    scf.if %36 {
      %c0_30 = arith.constant 0 : index
      %c0_31 = arith.constant 0 : index
      %c0_32 = arith.constant 0 : index
      %43 = vector.load %arg7[%c0_30, %c0_31, %c0_32] : memref<1x1x32xf32, #tpu.memory_space<vmem>>, vector<1x1x32xf32>
      %44 = vector.shape_cast %43 : vector<1x1x32xf32> to vector<1x32xf32>
      %45 = vector.shape_cast %33 : vector<1x32xf32> to vector<1x1x32xf32>
      tpu.vector_store %arg7[%c0_30, %c0_31, %c0_32], %45 {strides = array<i32>} : memref<1x1x32xf32, #tpu.memory_space<vmem>>, vector<1x1x32xf32>,
    } else {
    }
    %c0_i32_26 = arith.constant 0 : i32
    %37 = arith.cmpi ne, %arg1, %c0_i32_26 : i32
    %38 = arith.extui %37 : i1 to i32
    %c0_i32_27 = arith.constant 0 : i32
    %39 = arith.cmpi ne, %38, %c0_i32_27 : i32
    scf.if %39 {
      %c0_30 = arith.constant 0 : index
      %c0_31 = arith.constant 0 : index
      %c0_32 = arith.constant 0 : index
      %43 = vector.load %arg7[%c0_30, %c0_31, %c0_32] : memref<1x1x32xf32, #tpu.memory_space<vmem>>, vector<1x1x32xf32>
      %44 = vector.shape_cast %43 : vector<1x1x32xf32> to vector<1x32xf32>
      %45 = arith.maximumf %44, %33 : vector<1x32xf32>
      %c0_33 = arith.constant 0 : index
      %c0_34 = arith.constant 0 : index
      %c0_35 = arith.constant 0 : index
      %46 = vector.load %arg7[%c0_33, %c0_34, %c0_35] : memref<1x1x32xf32, #tpu.memory_space<vmem>>, vector<1x1x32xf32>
      %47 = vector.shape_cast %46 : vector<1x1x32xf32> to vector<1x32xf32>
      %48 = vector.shape_cast %45 : vector<1x32xf32> to vector<1x1x32xf32>
      tpu.vector_store %arg7[%c0_33, %c0_34, %c0_35], %48 {strides = array<i32>} : memref<1x1x32xf32, #tpu.memory_space<vmem>>, vector<1x1x32xf32>,
    } else {
    }
    %c0_i32_28 = arith.constant 0 : i32
    %40 = arith.cmpi eq, %arg1, %c0_i32_28 : i32
    %41 = arith.extui %40 : i1 to i32
    %c0_i32_29 = arith.constant 0 : i32
    %42 = arith.cmpi ne, %41, %c0_i32_29 : i32
    scf.if %42 {
      %c0_30 = arith.constant 0 : index
      %c0_31 = arith.constant 0 : index
      %c0_32 = arith.constant 0 : index
      %43 = vector.load %arg7[%c0_30, %c0_31, %c0_32] : memref<1x1x32xf32, #tpu.memory_space<vmem>>, vector<1x1x32xf32>
      %44 = vector.shape_cast %43 : vector<1x1x32xf32> to vector<1x32xf32>
      %45 = arith.addf %44, %10 : vector<1x32xf32>
      %c0_33 = arith.constant 0 : index
      %c0_34 = arith.constant 0 : index
      %c0_35 = arith.constant 0 : index
      %46 = vector.load %arg7[%c0_33, %c0_34, %c0_35] : memref<1x1x32xf32, #tpu.memory_space<vmem>>, vector<1x1x32xf32>
      %47 = vector.shape_cast %46 : vector<1x1x32xf32> to vector<1x32xf32>
      %48 = vector.shape_cast %45 : vector<1x32xf32> to vector<1x1x32xf32>
      tpu.vector_store %arg7[%c0_33, %c0_34, %c0_35], %48 {strides = array<i32>} : memref<1x1x32xf32, #tpu.memory_space<vmem>>, vector<1x1x32xf32>,
    } else {
    }
    return
  }
  func.func @transform_0(%arg0: i32, %arg1: i32) -> (i32, i32, i32, i32) {
    %c0_i32 = arith.constant 0 : i32
    %c0_i32_0 = arith.constant 0 : i32
    %c0_i32_1 = arith.constant 0 : i32
    return %c0_i32, %arg0, %arg1, %c0_i32_0 : i32, i32, i32, i32
  }
  func.func @transform_1(%arg0: i32, %arg1: i32) -> (i32, i32, i32, i32) {
    %c0_i32 = arith.constant 0 : i32
    %c0_i32_0 = arith.constant 0 : i32
    %c0_i32_1 = arith.constant 0 : i32
    return %c0_i32, %arg0, %arg1, %c0_i32_0 : i32, i32, i32, i32
  }
  func.func @transform_2(%arg0: i32, %arg1: i32) -> (i32, i32) {
    %c0_i32 = arith.constant 0 : i32
    %c0_i32_0 = arith.constant 0 : i32
    %c0_i32_1 = arith.constant 0 : i32
    return %c0_i32, %c0_i32_0 : i32, i32
  }
  func.func @transform_3(%arg0: i32, %arg1: i32) -> (i32, i32) {
    %c0_i32 = arith.constant 0 : i32
    %c0_i32_0 = arith.constant 0 : i32
    %c0_i32_1 = arith.constant 0 : i32
    return %c0_i32, %c0_i32_0 : i32, i32
  }
  func.func @transform_4(%arg0: i32, %arg1: i32) -> (i32, i32) {
    %c0_i32 = arith.constant 0 : i32
    %c0_i32_0 = arith.constant 0 : i32
    %c0_i32_1 = arith.constant 0 : i32
    return %c0_i32, %c0_i32_0 : i32, i32
  }
  func.func @transform_5(%arg0: i32, %arg1: i32) -> (i32, i32, i32) {
    %c0_i32 = arith.constant 0 : i32
    %c0_i32_0 = arith.constant 0 : i32
    %c0_i32_1 = arith.constant 0 : i32
    return %arg0, %c0_i32, %c0_i32_0 : i32, i32, i32
  }
}

</mosaic_0001>

<llo_original>
// kernel: tpu_custom_call.1
$region0: #{tpu_custom_call.1}
  #allocation0 [shape = 'u32[]', space=smem, size = 0x4, offset = 0x4, fixed_abs, tag = 'smem constant byte address 0x4 - core index']
  #allocation1 [shape = 'u32[144,128]{1,0:T(1,128)}', space=vmem, size = 0x12000, scoped, tag = 'internal scratch']
  %s0 = inlined_call_operand.hbm [shape: f32[2,2,8,32], index: 0, kind: input, shape index: {}]
  %s1 = inlined_call_operand.hbm [shape: f32[2,2,8,32], index: 1, kind: input, shape index: {}]
  %s2 = inlined_call_operand.hbm [shape: bf16[32,32], index: 2, kind: input, shape index: {}]
  %s3 = inlined_call_operand.hbm [shape: bf16[32,32], index: 3, kind: input, shape index: {}]
  %s4 = inlined_call_operand.hbm [shape: f32[1,32], index: 4, kind: input, shape index: {}]
  %s5 = inlined_call_operand.hbm [shape: f32[2,1,32], index: 5, kind: output, shape index: {}]
  %s6 = sld [smem:[#allocation0]]
  $region85: #{tpu_custom_call.1} parent=0
    _
  %s8 = ssub.s32 1, %s6
  %s9 = scalar_select 0, %s8, %s6
  $region1: #{tpu_custom_call.1} parent=0
    #allocation2 [shape = 'u8[16384]{0}', space=vmem, size = 0x4000, scoped, tag = 'input window, operand 0']
    #allocation3 [shape = 's32[2]{0}', space=sflag, size = 0x8, scoped, tag = 'scoped memory for tpu_custom_call.1']
    #allocation4 [shape = 's32[2]{0}', space=sflag, size = 0x8, scoped, tag = 'scoped memory for tpu_custom_call.1']
    #allocation5 [shape = 'u8[16384]{0}', space=vmem, size = 0x4000, scoped, tag = 'input window, operand 1']
    #allocation6 [shape = 's32[2]{0}', space=sflag, size = 0x8, scoped, tag = 'scoped memory for tpu_custom_call.1']
    #allocation7 [shape = 'u8[8192]{0}', space=vmem, size = 0x2000, scoped, tag = 'input window, operand 2, single buffered']
    #allocation8 [shape = 'u8[8192]{0}', space=vmem, size = 0x2000, scoped, tag = 'input window, operand 3, single buffered']
    #allocation9 [shape = 's32[1]{0}', space=sflag, size = 0x4, scoped, tag = 'scoped memory for tpu_custom_call.1']
    #allocation10 [shape = 'u8[512]{0}', space=vmem, size = 0x400, scoped, tag = 'input window, operand 4, single buffered']
    #allocation11 [shape = 'u8[1024]{0}', space=vmem, size = 0x400, scoped, tag = 'output window, operand 0']
    %10 = vsyncpa [#allocation3], 0
    %s11 = scalar_lea.sflag [#allocation3], 1
    %12 = vsyncpa %s11, 0
    %13 = vsyncpa [#allocation6], 0
    %s14 = scalar_lea.sflag [#allocation6], 1
    %15 = vsyncpa %s14, 0
    %16 = vsyncpa [#allocation9], 0
    %17 = vsyncpa [#allocation4], 0
    %s18 = scalar_lea.sflag [#allocation4], 1
    %19 = vsyncpa %s18, 0
    loop: start=0, step=1, limit=4
    $region2: #{tpu_custom_call.1} parent=1 // loop_pre_header
      _
    $region3: #{tpu_custom_call.1} parent=1 // loop_header
      %s21 = sphi 0, %s25
      %p22 = scmp.ge.s32.totalorder %s21, 4
      %s28 = sphi 0, %s40
      %s29 = sphi 0, %s36
      %s30 = sphi 0, %s28
      %s31 = sphi 0, %s29
      %s32 = sphi 0, %s30
      %s33 = sphi 0, %s31
      %s45 = sphi 0, %s47
      %s48 = sphi 0, %s45
      %s49 = sphi 0, %s48
      %s65 = sphi 0, %s49
      %s73 = sphi 0, %s75
      %s76 = sphi 0, %s73
      %s77 = sphi 0, %s76
      %s93 = sphi 0, %s77
      %s97 = sphi 0, %s97
      %s99 = sphi 0, %s97
      %s100 = sphi 0, %s99
      %s114 = sphi 0, %s100
      %s118 = sphi 0, %s118
      %s120 = sphi 0, %s118
      %s121 = sphi 0, %s120
      %s135 = sphi 0, %s121
      %s139 = sphi 0, %s139
      %s141 = sphi 0, %s139
      %s142 = sphi 0, %s141
      %s156 = sphi 0, %s142
      %s162 = sphi 0, %s164
      %s165 = sphi 0, %s162
      %s166 = sphi 0, %s165
      %s182 = sphi 0, %s166
    $region4: #{tpu_custom_call.1} parent=1 // loop_header_branch
      %24 = sbr.rel (%p22) target = $region8
    $region5: #{tpu_custom_call.1} parent=1 // loop_body
      %s26 = ssub.s32 %s21, 1
      %s27 = ssub.s32 %s21, 2
      %s34 = sadd.s32 1, %s29
      %p35 = scmp.ge.s32.totalorder %s34, 1
      %s36 = scalar_select %p35, 0, %s34
      %s37 = sadd.s32 1, %s28
      %s38 = scalar_select %p35, %s37, %s28
      %p39 = scmp.ge.s32.totalorder %s38, 2
      %s40 = scalar_select %p39, 0, %s38
      %s41 = ssub.s32 %s28, %s40
      %s42 = ssub.s32 %s29, %s36
      %s43 = sor.u32 %s41, %s42
      %p44 = scmp.eq.s32.totalorder %s43, 0
      %s46 = sadd.s32 %s45, 1
      %s47 = scalar_select %p44, %s45, %s46
      %p50 = pneg %p44
      %p51 = scmp.eq.s32.totalorder %s21, 1
      %p52 = por %p50, %p51
      %p53 = scmp.ne.s32.totalorder %s45, %s48
      %p54 = scmp.eq.s32.totalorder %s21, 0
      %p55 = por %p53, %p54
      %p56 = scmp.ne.s32.totalorder %s45, %s48
      %p57 = scmp.eq.s32.totalorder %s26, 1
      %p58 = por %p56, %p57
      %p59 = scmp.ne.s32.totalorder %s48, %s49
      %p60 = scmp.eq.s32.totalorder %s26, 0
      %p61 = por %p59, %p60
      %p62 = scmp.ne.s32.totalorder %s48, %s49
      %p63 = scmp.eq.s32.totalorder %s27, 1
      %p64 = por %p62, %p63
      %p66 = scmp.ne.s32.totalorder %s49, %s65
      %p67 = scmp.eq.s32.totalorder %s27, 0
      %p68 = por %p66, %p67
      %s69 = ssub.s32 %s28, %s40
      %s70 = ssub.s32 %s29, %s36
      %s71 = sor.u32 %s69, %s70
      %p72 = scmp.eq.s32.totalorder %s71, 0
      %s74 = sadd.s32 %s73, 1
      %s75 = scalar_select %p72, %s73, %s74
      %p78 = pneg %p72
      %p79 = scmp.eq.s32.totalorder %s21, 1
      %p80 = por %p78, %p79
      %p81 = scmp.ne.s32.totalorder %s73, %s76
      %p82 = scmp.eq.s32.totalorder %s21, 0
      %p83 = por %p81, %p82
      %p84 = scmp.ne.s32.totalorder %s73, %s76
      %p85 = scmp.eq.s32.totalorder %s26, 1
      %p86 = por %p84, %p85
      %p87 = scmp.ne.s32.totalorder %s76, %s77
      %p88 = scmp.eq.s32.totalorder %s26, 0
      %p89 = por %p87, %p88
      %p90 = scmp.ne.s32.totalorder %s76, %s77
      %p91 = scmp.eq.s32.totalorder %s27, 1
      %p92 = por %p90, %p91
      %p94 = scmp.ne.s32.totalorder %s77, %s93
      %p95 = scmp.eq.s32.totalorder %s27, 0
      %p96 = por %p94, %p95
      %s98 = sadd.s32 %s97, 1
      %p101 = scmp.eq.s32.totalorder %s21, 1
      %p102 = scmp.ne.s32.totalorder %s97, %s99
      %p103 = scmp.eq.s32.totalorder %s21, 0
      %p104 = por %p102, %p103
      %p105 = scmp.ne.s32.totalorder %s97, %s99
      %p106 = scmp.eq.s32.totalorder %s26, 1
      %p107 = por %p105, %p106
      %p108 = scmp.ne.s32.totalorder %s99, %s100
      %p109 = scmp.eq.s32.totalorder %s26, 0
      %p110 = por %p108, %p109
      %p111 = scmp.ne.s32.totalorder %s99, %s100
      %p112 = scmp.eq.s32.totalorder %s27, 1
      %p113 = por %p111, %p112
      %p115 = scmp.ne.s32.totalorder %s100, %s114
      %p116 = scmp.eq.s32.totalorder %s27, 0
      %p117 = por %p115, %p116
      %s119 = sadd.s32 %s118, 1
      %p122 = scmp.eq.s32.totalorder %s21, 1
      %p123 = scmp.ne.s32.totalorder %s118, %s120
      %p124 = scmp.eq.s32.totalorder %s21, 0
      %p125 = por %p123, %p124
      %p126 = scmp.ne.s32.totalorder %s118, %s120
      %p127 = scmp.eq.s32.totalorder %s26, 1
      %p128 = por %p126, %p127
      %p129 = scmp.ne.s32.totalorder %s120, %s121
      %p130 = scmp.eq.s32.totalorder %s26, 0
      %p131 = por %p129, %p130
      %p132 = scmp.ne.s32.totalorder %s120, %s121
      %p133 = scmp.eq.s32.totalorder %s27, 1
      %p134 = por %p132, %p133
      %p136 = scmp.ne.s32.totalorder %s121, %s135
      %p137 = scmp.eq.s32.totalorder %s27, 0
      %p138 = por %p136, %p137
      %s140 = sadd.s32 %s139, 1
      %p143 = scmp.eq.s32.totalorder %s21, 1
      %p144 = scmp.ne.s32.totalorder %s139, %s141
      %p145 = scmp.eq.s32.totalorder %s21, 0
      %p146 = por %p144, %p145
      %p147 = scmp.ne.s32.totalorder %s139, %s141
      %p148 = scmp.eq.s32.totalorder %s26, 1
      %p149 = por %p147, %p148
      %p150 = scmp.ne.s32.totalorder %s141, %s142
      %p151 = scmp.eq.s32.totalorder %s26, 0
      %p152 = por %p150, %p151
      %p153 = scmp.ne.s32.totalorder %s141, %s142
      %p154 = scmp.eq.s32.totalorder %s27, 1
      %p155 = por %p153, %p154
      %p157 = scmp.ne.s32.totalorder %s142, %s156
      %p158 = scmp.eq.s32.totalorder %s27, 0
      %p159 = por %p157, %p158
      %s160 = ssub.s32 %s28, %s40
      %p161 = scmp.eq.s32.totalorder %s160, 0
      %s163 = sadd.s32 %s162, 1
      %s164 = scalar_select %p161, %s162, %s163
      %p167 = pneg %p161
      %p168 = scmp.eq.s32.totalorder %s21, 1
      %p169 = por %p167, %p168
      %p170 = scmp.ne.s32.totalorder %s162, %s165
      %p171 = scmp.eq.s32.totalorder %s21, 0
      %p172 = por %p170, %p171
      %p173 = scmp.ne.s32.totalorder %s162, %s165
      %p174 = scmp.eq.s32.totalorder %s26, 1
      %p175 = por %p173, %p174
      %p176 = scmp.ne.s32.totalorder %s165, %s166
      %p177 = scmp.eq.s32.totalorder %s26, 0
      %p178 = por %p176, %p177
      %p179 = scmp.ne.s32.totalorder %s165, %s166
      %p180 = scmp.eq.s32.totalorder %s27, 1
      %p181 = por %p179, %p180
      %p183 = scmp.ne.s32.totalorder %s166, %s182
      %p184 = scmp.eq.s32.totalorder %s27, 0
      %p185 = por %p183, %p184
      %p186 = scmp.le.s32.totalorder 1, %s21
      %p187 = scmp.lt.s32.totalorder %s21, 3
      %p188 = pnand %p186, %p187
      %p189 = pneg %p188
      // Predicated region
      $region9: #{tpu_custom_call.1} parent=5 // pred_check
        _
      $region10: #{tpu_custom_call.1} parent=5 // pred_check_branch
        %191 = sbr.rel (%p188) target = $region12
      $region11: #{tpu_custom_call.1} parent=5 // pred_region
        %s192 = ssub.s32 %s21, 1
        // Predicated region
        $region13: #{tpu_custom_call.1} parent=11 // pred_check
          %p193 = pneg %p110
        $region14: #{tpu_custom_call.1} parent=11 // pred_check_branch
          %195 = sbr.rel (%p193) target = $region16
        $region15: #{tpu_custom_call.1} parent=11 // pred_region
          %s197 = ssub.s32 256, 256
          %198 = vsyncadd [#allocation6], %s197
          %s199 = sshll.u32 [#allocation7], 4
          %s200 = int_to_ptr.vmem [resolvable:$true] %s199
          %205 = dma.hbm_to_vmem [thread:$0]  %s2, 256, %s200, [#allocation6], 64, 64, 4
        $region16: #{tpu_custom_call.1} parent=11 // pred_fallthru
          _
        // Predicated region
        $region17: #{tpu_custom_call.1} parent=11 // pred_check
          %p206 = pneg %p131
        $region18: #{tpu_custom_call.1} parent=11 // pred_check_branch
          %208 = sbr.rel (%p206) target = $region20
        $region19: #{tpu_custom_call.1} parent=11 // pred_region
          %s210 = ssub.s32 256, 256
          %211 = vsyncadd [#allocation9], %s210
          %s212 = sshll.u32 [#allocation8], 4
          %s213 = int_to_ptr.vmem [resolvable:$true] %s212
          %218 = dma.hbm_to_vmem [thread:$0]  %s3, 256, %s213, [#allocation9], 64, 64, 4
        $region20: #{tpu_custom_call.1} parent=11 // pred_fallthru
          _
        // Predicated region
        $region21: #{tpu_custom_call.1} parent=11 // pred_check
          %p219 = pneg %p152
        $region22: #{tpu_custom_call.1} parent=11 // pred_check_branch
          %221 = sbr.rel (%p219) target = $region24
        $region23: #{tpu_custom_call.1} parent=11 // pred_region
          %s223 = ssub.s32 16, 16
          %224 = vsyncadd [#allocation9], %s223
          %s226 = sshll.u32 [#allocation10], 4
          %s227 = int_to_ptr.vmem [resolvable:$true] %s226
          %229 = dma.hbm_to_vmem [thread:$0]  %s4, 16, %s227, [#allocation9]
        $region24: #{tpu_custom_call.1} parent=11 // pred_fallthru
          _
      $region12: #{tpu_custom_call.1} parent=5 // pred_fallthru
        _
      %p230 = scmp.lt.s32.totalorder %s21, 2
      // Predicated region
      $region25: #{tpu_custom_call.1} parent=5 // pred_check
        %p231 = pneg %p230
      $region26: #{tpu_custom_call.1} parent=5 // pred_check_branch
        %233 = sbr.rel (%p231) target = $region28
      $region27: #{tpu_custom_call.1} parent=5 // pred_region
        // Predicated region
        $region29: #{tpu_custom_call.1} parent=27 // pred_check
          %p234 = pneg %p55
        $region30: #{tpu_custom_call.1} parent=27 // pred_check_branch
          %236 = sbr.rel (%p234) target = $region32
        $region31: #{tpu_custom_call.1} parent=27 // pred_region
          %s237 = sand.u32 %s45, 1
          %s238 = scalar_lea.sflag [#allocation3], %s237
          %s239 = sand.u32 %s45, 1
          %s240 = smul.addr %s239, 16
          %s241 = scalar_lea.vmem [#allocation2], %s240
          %s243 = ssub.s32 256, 256
          %244 = vsyncadd %s238, %s243
          %s245 = sadd.s32 %s29, %s28
          %s246 = smul.addr %s245, 128
          %s247 = scalar_lea.hbm %s0, %s246
          %s248 = sshll.u32 %s241, 4
          %s249 = int_to_ptr.vmem [resolvable:$true] %s248
          %254 = dma.hbm_to_vmem [thread:$0]  %s247, 256, %s249, %s238, 256, 128, 8
        $region32: #{tpu_custom_call.1} parent=27 // pred_fallthru
          _
        // Predicated region
        $region33: #{tpu_custom_call.1} parent=27 // pred_check
          %p255 = pneg %p83
        $region34: #{tpu_custom_call.1} parent=27 // pred_check_branch
          %257 = sbr.rel (%p255) target = $region36
        $region35: #{tpu_custom_call.1} parent=27 // pred_region
          %s258 = sand.u32 %s21, 1
          %s259 = scalar_lea.sflag [#allocation6], %s258
          %s260 = sand.u32 %s73, 1
          %s261 = smul.addr %s260, 16
          %s262 = scalar_lea.vmem [#allocation5], %s261
          %s264 = ssub.s32 256, 256
          %265 = vsyncadd %s259, %s264
          %s266 = sadd.s32 %s29, %s28
          %s267 = smul.addr %s266, 128
          %s268 = scalar_lea.hbm %s1, %s267
          %s269 = sshll.u32 %s262, 4
          %s270 = int_to_ptr.vmem [resolvable:$true] %s269
          %275 = dma.hbm_to_vmem [thread:$0]  %s268, 256, %s270, %s259, 256, 128, 8
        $region36: #{tpu_custom_call.1} parent=27 // pred_fallthru
          _
      $region28: #{tpu_custom_call.1} parent=5 // pred_fallthru
        _
      %p276 = scmp.le.s32.totalorder 1, %s21
      %p277 = scmp.lt.s32.totalorder %s21, 3
      %p278 = pnand %p276, %p277
      %p279 = pneg %p278
      // Predicated region
      $region37: #{tpu_custom_call.1} parent=5 // pred_check
        _
      $region38: #{tpu_custom_call.1} parent=5 // pred_check_branch
        %281 = sbr.rel (%p278) target = $region40
      $region39: #{tpu_custom_call.1} parent=5 // pred_region
        %s282 = ssub.s32 %s21, 1
        %s283 = sand.u32 %s48, 1
        %s284 = scalar_lea.sflag [#allocation3], %s283
        %s285 = sand.u32 %s48, 1
        %s286 = smul.addr %s285, 16
        %s287 = scalar_lea.vmem [#allocation2], %s286
        // Predicated region
        $region41: #{tpu_custom_call.1} parent=39 // pred_check
          %p288 = pneg %p61
        $region42: #{tpu_custom_call.1} parent=39 // pred_check_branch
          %290 = sbr.rel (%p288) target = $region44
        $region43: #{tpu_custom_call.1} parent=39 // pred_region
          %291 = dma.done %s284, 256
        $region44: #{tpu_custom_call.1} parent=39 // pred_fallthru
          _
        %s292 = sand.u32 %s26, 1
        %s293 = scalar_lea.sflag [#allocation6], %s292
        %s294 = sand.u32 %s76, 1
        %s295 = smul.addr %s294, 16
        %s296 = scalar_lea.vmem [#allocation5], %s295
        // Predicated region
        $region45: #{tpu_custom_call.1} parent=39 // pred_check
          %p297 = pneg %p89
        $region46: #{tpu_custom_call.1} parent=39 // pred_check_branch
          %299 = sbr.rel (%p297) target = $region48
        $region47: #{tpu_custom_call.1} parent=39 // pred_region
          %300 = dma.done %s293, 256
        $region48: #{tpu_custom_call.1} parent=39 // pred_fallthru
          _
        // Predicated region
        $region49: #{tpu_custom_call.1} parent=39 // pred_check
          %p301 = pneg %p110
        $region50: #{tpu_custom_call.1} parent=39 // pred_check_branch
          %303 = sbr.rel (%p301) target = $region52
        $region51: #{tpu_custom_call.1} parent=39 // pred_region
          %304 = dma.done [#allocation6], 256
        $region52: #{tpu_custom_call.1} parent=39 // pred_fallthru
          _
        // Predicated region
        $region53: #{tpu_custom_call.1} parent=39 // pred_check
          %p305 = pneg %p131
        $region54: #{tpu_custom_call.1} parent=39 // pred_check_branch
          %307 = sbr.rel (%p305) target = $region56
        $region55: #{tpu_custom_call.1} parent=39 // pred_region
          %308 = dma.done [#allocation9], 256
        $region56: #{tpu_custom_call.1} parent=39 // pred_fallthru
          _
        // Predicated region
        $region57: #{tpu_custom_call.1} parent=39 // pred_check
          %p309 = pneg %p152
        $region58: #{tpu_custom_call.1} parent=39 // pred_check_branch
          %311 = sbr.rel (%p309) target = $region60
        $region59: #{tpu_custom_call.1} parent=39 // pred_region
          %312 = dma.done [#allocation9], 16
        $region60: #{tpu_custom_call.1} parent=39 // pred_fallthru
          _
        %s313 = sand.u32 %s48, 1
        %s314 = scalar_lea.sflag [#allocation3], %s313
        %s315 = sand.u32 %s48, 1
        %s316 = smul.addr %s315, 16
        %s317 = scalar_lea.vmem [#allocation2], %s316
        %p318 = pneg %p61
        %p319 = pneg %p58
        %s320 = sand.u32 %s26, 1
        %s321 = scalar_lea.sflag [#allocation6], %s320
        %s322 = sand.u32 %s76, 1
        %s323 = smul.addr %s322, 16
        %s324 = scalar_lea.vmem [#allocation5], %s323
        %p325 = pneg %p89
        %p326 = pneg %p86
        %p327 = pneg %p110
        %p328 = pneg %p107
        %p329 = pneg %p131
        %p330 = pneg %p128
        %p331 = pneg %p152
        %p332 = pneg %p149
        %p333 = pneg %p178
        %p334 = pneg %p175
        %s335 = sand.u32 %s165, 1
        %s336 = scalar_lea.sflag [#allocation4], %s335
        %s337 = sand.u32 %s165, 1
        %s338 = scalar_lea.vmem [#allocation11], %s337
        %v340 = vld [vmem:[%s287] sm:$0xff]
        %s341 = scalar_lea.vmem %s287, 8 [#allocation2]
        %v342 = vld [vmem:[%s341] sm:$0xff]
        %v343 = vld [vmem:[%s296] sm:$0xff]
        %s344 = scalar_lea.vmem %s296, 8 [#allocation5]
        %v345 = vld [vmem:[%s344] sm:$0xff]
        %v346 = vld [vmem:[#allocation7] sm:$0xf]
        %v347 = vld [vmem:[#allocation7 + $0x4] sm:$0xf]
        %v348 = vld [vmem:[#allocation7 + $0x8] sm:$0xf]
        %v349 = vld [vmem:[#allocation7 + $0xc] sm:$0xf]
        %v350 = vld [vmem:[#allocation8] sm:$0xf]
        %v351 = vld [vmem:[#allocation8 + $0x4] sm:$0xf]
        %v352 = vld [vmem:[#allocation8 + $0x8] sm:$0xf]
        %v353 = vld [vmem:[#allocation8 + $0xc] sm:$0xf]
        %v354 = vld [vmem:[#allocation10] sm:$0x1]
        %v355 = vsub.f32 %v340, %v342
        %v356 = vsub.f32 %v343, %v345
        %v357 = vmul.f32 %v340, %v342
        %v358 = vmul.f32 %v343, %v345
        %v359 = vpack.c.bf16 %v356, %v355
        %v360 = vpack.c.bf16 %v358, %v357
        %v365 = vunpack.c.l.b16 %v350
        %v366 = vunpack.c.l.b16 %v351
        %v367 = vunpack.c.l.b16 %v352
        %v368 = vunpack.c.l.b16 %v353
        %v369 = vpack.c.b16 %v366, %v365
        %v370 = vpack.c.b16 %v368, %v367
        %vm373 = vcmask 261120
        %v375 = vsel %vm373, %v360, 0
        %377 = vmatprep.subr.bf16.mxu0 0
        %378 = vmatpush1.bf16.msra.mxu0 %v369
        %379 = vmatprep.subr.bf16.mxu0 0
        %380 = vmatpush1.bf16.msra.mxu0 %v370
        %381 = vmatprep.subr.bf16.mxu0 0
        %382 = vmatpush1.bf16.msra.mxu0 0
        %383 = vmatprep.subr.bf16.mxu0 0
        %384 = vmatpush1.bf16.msra.mxu0 0
        %385 = vmatprep.subr.bf16.mxu0 0
        %386 = vmatpush1.bf16.msra.mxu0 0
        %387 = vmatprep.subr.bf16.mxu0 0
        %388 = vmatpush1.bf16.msra.mxu0 0
        %389 = vmatprep.subr.bf16.mxu0 0
        %390 = vmatpush1.bf16.msra.mxu0 0
        %391 = vmatprep.subr.bf16.mxu0 0
        %392 = vmatpush1.bf16.msra.mxu0 0
        %393 = vmatprep.subr.bf16.mxu0 0
        %394 = vmatpush1.bf16.msra.mxu0 0
        %395 = vmatprep.subr.bf16.mxu0 0
        %396 = vmatpush1.bf16.msra.mxu0 0
        %397 = vmatprep.subr.bf16.mxu0 0
        %398 = vmatpush1.bf16.msra.mxu0 0
        %399 = vmatprep.subr.bf16.mxu0 0
        %400 = vmatpush1.bf16.msra.mxu0 0
        %401 = vmatprep.subr.bf16.mxu0 0
        %402 = vmatpush1.bf16.msra.mxu0 0
        %403 = vmatprep.subr.bf16.mxu0 0
        %404 = vmatpush1.bf16.msra.mxu0 0
        %405 = vmatprep.subr.bf16.mxu0 0
        %406 = vmatpush1.bf16.msra.mxu0 0
        %407 = vmatprep.subr.bf16.mxu0 0
        %408 = vmatpush1.bf16.msra.mxu0 0
        %409 = vmatprep.mubr.bf16.mxu0 0
        %410 = vmatmul.mubr.bf16.gmra.mrb[0].mxu0 %v375
        %v411 = vpop.f32.mrb[0].mxu0
        %v412 = vadd.f32 0.0, %v411
        %v413 = vpop.f32.mrb[0].mxu0
        %v414 = vpop.f32.mrb[0].mxu0
        %v415 = vadd.f32 0.0, %v414
        %v416 = vpop.f32.mrb[0].mxu0
        %417 = vdwg.mxu0
        %v422 = vunpack.c.l.b16 %v346
        %v423 = vunpack.c.l.b16 %v347
        %v424 = vunpack.c.l.b16 %v348
        %v425 = vunpack.c.l.b16 %v349
        %v426 = vpack.c.b16 %v423, %v422
        %v427 = vpack.c.b16 %v425, %v424
        %v431 = vsel %vm373, %v359, 0
        %433 = vmatprep.subr.bf16.mxu0 0
        %434 = vmatpush1.bf16.msra.mxu0 %v426
        %435 = vmatprep.subr.bf16.mxu0 0
        %436 = vmatpush1.bf16.msra.mxu0 %v427
        %437 = vmatprep.subr.bf16.mxu0 0
        %438 = vmatpush1.bf16.msra.mxu0 0
        %439 = vmatprep.subr.bf16.mxu0 0
        %440 = vmatpush1.bf16.msra.mxu0 0
        %441 = vmatprep.subr.bf16.mxu0 0
        %442 = vmatpush1.bf16.msra.mxu0 0
        %443 = vmatprep.subr.bf16.mxu0 0
        %444 = vmatpush1.bf16.msra.mxu0 0
        %445 = vmatprep.subr.bf16.mxu0 0
        %446 = vmatpush1.bf16.msra.mxu0 0
        %447 = vmatprep.subr.bf16.mxu0 0
        %448 = vmatpush1.bf16.msra.mxu0 0
        %449 = vmatprep.subr.bf16.mxu0 0
        %450 = vmatpush1.bf16.msra.mxu0 0
        %451 = vmatprep.subr.bf16.mxu0 0
        %452 = vmatpush1.bf16.msra.mxu0 0
        %453 = vmatprep.subr.bf16.mxu0 0
        %454 = vmatpush1.bf16.msra.mxu0 0
        %455 = vmatprep.subr.bf16.mxu0 0
        %456 = vmatpush1.bf16.msra.mxu0 0
        %457 = vmatprep.subr.bf16.mxu0 0
        %458 = vmatpush1.bf16.msra.mxu0 0
        %459 = vmatprep.subr.bf16.mxu0 0
        %460 = vmatpush1.bf16.msra.mxu0 0
        %461 = vmatprep.subr.bf16.mxu0 0
        %462 = vmatpush1.bf16.msra.mxu0 0
        %463 = vmatprep.subr.bf16.mxu0 0
        %464 = vmatpush1.bf16.msra.mxu0 0
        %465 = vmatprep.mubr.bf16.mxu0 0
        %466 = vmatmul.mubr.bf16.gmra.mrb[0].mxu0 %v431
        %v467 = vpop.f32.mrb[0].mxu0
        %v468 = vadd.f32 %v412, %v467
        %v469 = vpop.f32.mrb[0].mxu0
        %v470 = vpop.f32.mrb[0].mxu0
        %v471 = vadd.f32 %v415, %v470
        %v472 = vpop.f32.mrb[0].mxu0
        %473 = vdwg.mxu0
        %v475 = vlaneseq
        %v476 = vshrl.u32 %v475, 7
        %v477 = vsub.s32 0, %v476
        %v478 = vrot.slane %v354, %v477
        %v480 = vadd.f32 %v468, %v478
        %v481 = vadd.f32 %v471, %v478
        %v482 = vmax.f32 %v480, 0.0
        %v483 = vmax.f32 %v481, 0.0
        %v484 = vpack.c.bf16 %v483, %v482
        %v486 = vrot.slane %v484, 4
        %v488 = vsel %vm373, %v486, 0
        %490 = vmatprep.subr.bf16.mxu0 0
        %491 = vmatpush1.bf16.msra.mxu0 %v369
        %492 = vmatprep.subr.bf16.mxu0 0
        %493 = vmatpush1.bf16.msra.mxu0 %v370
        %494 = vmatprep.subr.bf16.mxu0 0
        %495 = vmatpush1.bf16.msra.mxu0 0
        %496 = vmatprep.subr.bf16.mxu0 0
        %497 = vmatpush1.bf16.msra.mxu0 0
        %498 = vmatprep.subr.bf16.mxu0 0
        %499 = vmatpush1.bf16.msra.mxu0 0
        %500 = vmatprep.subr.bf16.mxu0 0
        %501 = vmatpush1.bf16.msra.mxu0 0
        %502 = vmatprep.subr.bf16.mxu0 0
        %503 = vmatpush1.bf16.msra.mxu0 0
        %504 = vmatprep.subr.bf16.mxu0 0
        %505 = vmatpush1.bf16.msra.mxu0 0
        %506 = vmatprep.subr.bf16.mxu0 0
        %507 = vmatpush1.bf16.msra.mxu0 0
        %508 = vmatprep.subr.bf16.mxu0 0
        %509 = vmatpush1.bf16.msra.mxu0 0
        %510 = vmatprep.subr.bf16.mxu0 0
        %511 = vmatpush1.bf16.msra.mxu0 0
        %512 = vmatprep.subr.bf16.mxu0 0
        %513 = vmatpush1.bf16.msra.mxu0 0
        %514 = vmatprep.subr.bf16.mxu0 0
        %515 = vmatpush1.bf16.msra.mxu0 0
        %516 = vmatprep.subr.bf16.mxu0 0
        %517 = vmatpush1.bf16.msra.mxu0 0
        %518 = vmatprep.subr.bf16.mxu0 0
        %519 = vmatpush1.bf16.msra.mxu0 0
        %520 = vmatprep.subr.bf16.mxu0 0
        %521 = vmatpush1.bf16.msra.mxu0 0
        %522 = vmatprep.mubr.bf16.mxu0 0
        %523 = vmatmul.mubr.bf16.gmra.mrb[0].mxu0 %v488
        %v524 = vpop.f32.mrb[0].mxu0
        %v525 = vadd.f32 0.0, %v524
        %v526 = vpop.f32.mrb[0].mxu0
        %v527 = vpop.f32.mrb[0].mxu0
        %v528 = vpop.f32.mrb[0].mxu0
        %529 = vdwg.mxu0
        %v531 = vsel %vm373, %v484, 0
        %533 = vmatprep.subr.bf16.mxu0 0
        %534 = vmatpush1.bf16.msra.mxu0 %v426
        %535 = vmatprep.subr.bf16.mxu0 0
        %536 = vmatpush1.bf16.msra.mxu0 %v427
        %537 = vmatprep.subr.bf16.mxu0 0
        %538 = vmatpush1.bf16.msra.mxu0 0
        %539 = vmatprep.subr.bf16.mxu0 0
        %540 = vmatpush1.bf16.msra.mxu0 0
        %541 = vmatprep.subr.bf16.mxu0 0
        %542 = vmatpush1.bf16.msra.mxu0 0
        %543 = vmatprep.subr.bf16.mxu0 0
        %544 = vmatpush1.bf16.msra.mxu0 0
        %545 = vmatprep.subr.bf16.mxu0 0
        %546 = vmatpush1.bf16.msra.mxu0 0
        %547 = vmatprep.subr.bf16.mxu0 0
        %548 = vmatpush1.bf16.msra.mxu0 0
        %549 = vmatprep.subr.bf16.mxu0 0
        %550 = vmatpush1.bf16.msra.mxu0 0
        %551 = vmatprep.subr.bf16.mxu0 0
        %552 = vmatpush1.bf16.msra.mxu0 0
        %553 = vmatprep.subr.bf16.mxu0 0
        %554 = vmatpush1.bf16.msra.mxu0 0
        %555 = vmatprep.subr.bf16.mxu0 0
        %556 = vmatpush1.bf16.msra.mxu0 0
        %557 = vmatprep.subr.bf16.mxu0 0
        %558 = vmatpush1.bf16.msra.mxu0 0
        %559 = vmatprep.subr.bf16.mxu0 0
        %560 = vmatpush1.bf16.msra.mxu0 0
        %561 = vmatprep.subr.bf16.mxu0 0
        %562 = vmatpush1.bf16.msra.mxu0 0
        %563 = vmatprep.subr.bf16.mxu0 0
        %564 = vmatpush1.bf16.msra.mxu0 0
        %565 = vmatprep.mubr.bf16.mxu0 0
        %566 = vmatmul.mubr.bf16.gmra.mrb[0].mxu0 %v531
        %v567 = vpop.f32.mrb[0].mxu0
        %v568 = vadd.f32 %v525, %v567
        %v569 = vpop.f32.mrb[0].mxu0
        %v570 = vpop.f32.mrb[0].mxu0
        %v571 = vpop.f32.mrb[0].mxu0
        %572 = vdwg.mxu0
        %v573 = vsel %vm373, %v568, -inf
        %v574 = vrot.slane %v573, 4
        %v575 = vmax.f32 %v573, %v574
        %v576 = vrot.slane %v575, 2
        %v577 = vmax.f32 %v575, %v576
        %v578 = vrot.slane %v577, 1
        %v579 = vmax.f32 %v577, %v578
        %p580 = scmp.eq.s32.totalorder %s31, 0
        // Predicated region
        $region61: #{tpu_custom_call.1} parent=39 // pred_check
          %p581 = pneg %p580
        $region62: #{tpu_custom_call.1} parent=39 // pred_check_branch
          %583 = sbr.rel (%p581) target = $region64
        $region63: #{tpu_custom_call.1} parent=39 // pred_region
          %vm584 = vcmask 253952
          %585 = vst.msk [vmem:[%s338] sm:$0x1] %vm584, %v579
        $region64: #{tpu_custom_call.1} parent=39 // pred_fallthru
          _
        %p586 = scmp.ne.s32.totalorder %s31, 0
        // Predicated region
        $region65: #{tpu_custom_call.1} parent=39 // pred_check
          %p587 = pneg %p586
        $region66: #{tpu_custom_call.1} parent=39 // pred_check_branch
          %589 = sbr.rel (%p587) target = $region68
        $region67: #{tpu_custom_call.1} parent=39 // pred_region
          %v590 = vld [vmem:[%s338] sm:$0x1]
          %v591 = vmax.f32 %v590, %v579
          %vm592 = vcmask 253952
          %593 = vst.msk [vmem:[%s338] sm:$0x1] %vm592, %v591
        $region68: #{tpu_custom_call.1} parent=39 // pred_fallthru
          _
        // Predicated region
        $region69: #{tpu_custom_call.1} parent=39 // pred_check
          %p594 = pneg %p580
        $region70: #{tpu_custom_call.1} parent=39 // pred_check_branch
          %596 = sbr.rel (%p594) target = $region72
        $region71: #{tpu_custom_call.1} parent=39 // pred_region
          %v597 = vld [vmem:[%s338] sm:$0x1]
          %v598 = vadd.f32 %v597, %v354
          %vm599 = vcmask 253952
          %600 = vst.msk [vmem:[%s338] sm:$0x1] %vm599, %v598
        $region72: #{tpu_custom_call.1} parent=39 // pred_fallthru
          _
        %s601 = sand.u32 %s165, 1
        %s602 = scalar_lea.sflag [#allocation4], %s601
        %s603 = sand.u32 %s165, 1
        %s604 = scalar_lea.vmem [#allocation11], %s603
        // Predicated region
        $region73: #{tpu_custom_call.1} parent=39 // pred_check
          %p605 = pneg %p175
        $region74: #{tpu_custom_call.1} parent=39 // pred_check_branch
          %607 = sbr.rel (%p605) target = $region76
        $region75: #{tpu_custom_call.1} parent=39 // pred_region
          %s609 = ssub.s32 16, 16
          %610 = vsyncadd %s602, %s609
          %s611 = smul.addr %s30, 16
          %s612 = scalar_lea.hbm %s5, %s611
          %s614 = sshll.u32 %s604, 4
          %s615 = int_to_ptr.vmem [resolvable:$true] %s614
          %617 = dma.vmem_to_hbm [thread:$0]  %s615, 16, %s612, %s602
        $region76: #{tpu_custom_call.1} parent=39 // pred_fallthru
          _
      $region40: #{tpu_custom_call.1} parent=5 // pred_fallthru
        _
      %p618 = scmp.le.s32.totalorder 2, %s21
      // Predicated region
      $region77: #{tpu_custom_call.1} parent=5 // pred_check
        %p619 = pneg %p618
      $region78: #{tpu_custom_call.1} parent=5 // pred_check_branch
        %621 = sbr.rel (%p619) target = $region80
      $region79: #{tpu_custom_call.1} parent=5 // pred_region
        %s622 = ssub.s32 %s21, 2
        // Predicated region
        $region81: #{tpu_custom_call.1} parent=79 // pred_check
          %p623 = pneg %p181
        $region82: #{tpu_custom_call.1} parent=79 // pred_check_branch
          %625 = sbr.rel (%p623) target = $region84
        $region83: #{tpu_custom_call.1} parent=79 // pred_region
          %s626 = sand.u32 %s166, 1
          %s627 = scalar_lea.sflag [#allocation4], %s626
          %s628 = sand.u32 %s166, 1
          %s629 = scalar_lea.vmem [#allocation11], %s628
          %630 = dma.done %s627, 16
        $region84: #{tpu_custom_call.1} parent=79 // pred_fallthru
          _
      $region80: #{tpu_custom_call.1} parent=5 // pred_fallthru
        _
    $region6: #{tpu_custom_call.1} parent=1 // loop_footer
      %s25 = sadd.s32 1, %s21
    $region7: #{tpu_custom_call.1} parent=1 // loop_footer_branch
      %20 = sbr.rel target = $region3
    $region8: #{tpu_custom_call.1} parent=1 // loop_exit
      _
    %631 = vsyncpa [#allocation3], 1
    %s632 = scalar_lea.sflag [#allocation3], 1
    %633 = vsyncpa %s632, 1
    %634 = vsyncpa [#allocation6], 1
    %s635 = scalar_lea.sflag [#allocation6], 1
    %636 = vsyncpa %s635, 1
    %637 = vsyncpa [#allocation9], 1
    %638 = vsyncpa [#allocation4], 1
    %s639 = scalar_lea.sflag [#allocation4], 1
    %640 = vsyncpa %s639, 1

// kernel: tpu_custom_call.1
$region0: #{tpu_custom_call.1}
  #allocation0 [shape = 'u32[]', space=smem, size = 0x4, offset = 0x4, fixed_abs, tag = 'smem constant byte address 0x4 - core index']
  #allocation1 [shape = 'u32[144,128]{1,0:T(1,128)}', space=vmem, size = 0x12000, scoped, tag = 'internal scratch']
  %s0 = inlined_call_operand.hbm [shape: f32[2,2,8,32], index: 0, kind: input, shape index: {}]
  %s1 = inlined_call_operand.hbm [shape: f32[2,2,8,32], index: 1, kind: input, shape index: {}]
  %s2 = inlined_call_operand.hbm [shape: bf16[32,32], index: 2, kind: input, shape index: {}]
  %s3 = inlined_call_operand.hbm [shape: bf16[32,32], index: 3, kind: input, shape index: {}]
  %s4 = inlined_call_operand.hbm [shape: f32[1,32], index: 4, kind: input, shape index: {}]
  %s5 = inlined_call_operand.hbm [shape: f32[2,1,32], index: 5, kind: output, shape index: {}]
  %s6 = sld [smem:[#allocation0]]
  $region85: #{tpu_custom_call.1} parent=0
    _
  %s8 = ssub.s32 1, %s6
  %s9 = scalar_select 0, %s8, %s6
  $region1: #{tpu_custom_call.1} parent=0
    #allocation2 [shape = 'u8[16384]{0}', space=vmem, size = 0x4000, scoped, tag = 'input window, operand 0']
    #allocation3 [shape = 's32[2]{0}', space=sflag, size = 0x8, scoped, tag = 'scoped memory for tpu_custom_call.1']
    #allocation4 [shape = 's32[2]{0}', space=sflag, size = 0x8, scoped, tag = 'scoped memory for tpu_custom_call.1']
    #allocation5 [shape = 'u8[16384]{0}', space=vmem, size = 0x4000, scoped, tag = 'input window, operand 1']
    #allocation6 [shape = 's32[2]{0}', space=sflag, size = 0x8, scoped, tag = 'scoped memory for tpu_custom_call.1']
    #allocation7 [shape = 'u8[8192]{0}', space=vmem, size = 0x2000, scoped, tag = 'input window, operand 2, single buffered']
    #allocation8 [shape = 'u8[8192]{0}', space=vmem, size = 0x2000, scoped, tag = 'input window, operand 3, single buffered']
    #allocation9 [shape = 's32[1]{0}', space=sflag, size = 0x4, scoped, tag = 'scoped memory for tpu_custom_call.1']
    #allocation10 [shape = 'u8[512]{0}', space=vmem, size = 0x400, scoped, tag = 'input window, operand 4, single buffered']
    #allocation11 [shape = 'u8[1024]{0}', space=vmem, size = 0x400, scoped, tag = 'output window, operand 0']
    %10 = vsyncpa [#allocation3], 0
    %s11 = scalar_lea.sflag [#allocation3], 1
    %12 = vsyncpa %s11, 0
    %13 = vsyncpa [#allocation6], 0
    %s14 = scalar_lea.sflag [#allocation6], 1
    %15 = vsyncpa %s14, 0
    %16 = vsyncpa [#allocation9], 0
    %17 = vsyncpa [#allocation4], 0
    %s18 = scalar_lea.sflag [#allocation4], 1
    %19 = vsyncpa %s18, 0
    loop: start=0, step=1, limit=4
    $region2: #{tpu_custom_call.1} parent=1 // loop_pre_header
      _
    $region3: #{tpu_custom_call.1} parent=1 // loop_header
      %s21 = sphi 0, %s25
      %p22 = scmp.ge.s32.totalorder %s21, 4
      %s28 = sphi 0, %s40
      %s29 = sphi 0, %s36
      %s30 = sphi 0, %s28
      %s31 = sphi 0, %s29
      %s32 = sphi 0, %s30
      %s33 = sphi 0, %s31
      %s45 = sphi 0, %s47
      %s48 = sphi 0, %s45
      %s49 = sphi 0, %s48
      %s65 = sphi 0, %s49
      %s73 = sphi 0, %s75
      %s76 = sphi 0, %s73
      %s77 = sphi 0, %s76
      %s93 = sphi 0, %s77
      %s97 = sphi 0, %s97
      %s99 = sphi 0, %s97
      %s100 = sphi 0, %s99
      %s114 = sphi 0, %s100
      %s118 = sphi 0, %s118
      %s120 = sphi 0, %s118
      %s121 = sphi 0, %s120
      %s135 = sphi 0, %s121
      %s139 = sphi 0, %s139
      %s141 = sphi 0, %s139
      %s142 = sphi 0, %s141
      %s156 = sphi 0, %s142
      %s162 = sphi 0, %s164
      %s165 = sphi 0, %s162
      %s166 = sphi 0, %s165
      %s182 = sphi 0, %s166
    $region4: #{tpu_custom_call.1} parent=1 // loop_header_branch
      %24 = sbr.rel (%p22) target = $region8
    $region5: #{tpu_custom_call.1} parent=1 // loop_body
      %s26 = ssub.s32 %s21, 1
      %s27 = ssub.s32 %s21, 2
      %s34 = sadd.s32 1, %s29
      %p35 = scmp.ge.s32.totalorder %s34, 1
      %s36 = scalar_select %p35, 0, %s34
      %s37 = sadd.s32 1, %s28
      %s38 = scalar_select %p35, %s37, %s28
      %p39 = scmp.ge.s32.totalorder %s38, 2
      %s40 = scalar_select %p39, 0, %s38
      %s41 = ssub.s32 %s28, %s40
      %s42 = ssub.s32 %s29, %s36
      %s43 = sor.u32 %s41, %s42
      %p44 = scmp.eq.s32.totalorder %s43, 0
      %s46 = sadd.s32 %s45, 1
      %s47 = scalar_select %p44, %s45, %s46
      %p50 = pneg %p44
      %p51 = scmp.eq.s32.totalorder %s21, 1
      %p52 = por %p50, %p51
      %p53 = scmp.ne.s32.totalorder %s45, %s48
      %p54 = scmp.eq.s32.totalorder %s21, 0
      %p55 = por %p53, %p54
      %p56 = scmp.ne.s32.totalorder %s45, %s48
      %p57 = scmp.eq.s32.totalorder %s26, 1
      %p58 = por %p56, %p57
      %p59 = scmp.ne.s32.totalorder %s48, %s49
      %p60 = scmp.eq.s32.totalorder %s26, 0
      %p61 = por %p59, %p60
      %p62 = scmp.ne.s32.totalorder %s48, %s49
      %p63 = scmp.eq.s32.totalorder %s27, 1
      %p64 = por %p62, %p63
      %p66 = scmp.ne.s32.totalorder %s49, %s65
      %p67 = scmp.eq.s32.totalorder %s27, 0
      %p68 = por %p66, %p67
      %s69 = ssub.s32 %s28, %s40
      %s70 = ssub.s32 %s29, %s36
      %s71 = sor.u32 %s69, %s70
      %p72 = scmp.eq.s32.totalorder %s71, 0
      %s74 = sadd.s32 %s73, 1
      %s75 = scalar_select %p72, %s73, %s74
      %p78 = pneg %p72
      %p79 = scmp.eq.s32.totalorder %s21, 1
      %p80 = por %p78, %p79
      %p81 = scmp.ne.s32.totalorder %s73, %s76
      %p82 = scmp.eq.s32.totalorder %s21, 0
      %p83 = por %p81, %p82
      %p84 = scmp.ne.s32.totalorder %s73, %s76
      %p85 = scmp.eq.s32.totalorder %s26, 1
      %p86 = por %p84, %p85
      %p87 = scmp.ne.s32.totalorder %s76, %s77
      %p88 = scmp.eq.s32.totalorder %s26, 0
      %p89 = por %p87, %p88
      %p90 = scmp.ne.s32.totalorder %s76, %s77
      %p91 = scmp.eq.s32.totalorder %s27, 1
      %p92 = por %p90, %p91
      %p94 = scmp.ne.s32.totalorder %s77, %s93
      %p95 = scmp.eq.s32.totalorder %s27, 0
      %p96 = por %p94, %p95
      %s98 = sadd.s32 %s97, 1
      %p101 = scmp.eq.s32.totalorder %s21, 1
      %p102 = scmp.ne.s32.totalorder %s97, %s99
      %p103 = scmp.eq.s32.totalorder %s21, 0
      %p104 = por %p102, %p103
      %p105 = scmp.ne.s32.totalorder %s97, %s99
      %p106 = scmp.eq.s32.totalorder %s26, 1
      %p107 = por %p105, %p106
      %p108 = scmp.ne.s32.totalorder %s99, %s100
      %p109 = scmp.eq.s32.totalorder %s26, 0
      %p110 = por %p108, %p109
      %p111 = scmp.ne.s32.totalorder %s99, %s100
      %p112 = scmp.eq.s32.totalorder %s27, 1
      %p113 = por %p111, %p112
      %p115 = scmp.ne.s32.totalorder %s100, %s114
      %p116 = scmp.eq.s32.totalorder %s27, 0
      %p117 = por %p115, %p116
      %s119 = sadd.s32 %s118, 1
      %p122 = scmp.eq.s32.totalorder %s21, 1
      %p123 = scmp.ne.s32.totalorder %s118, %s120
      %p124 = scmp.eq.s32.totalorder %s21, 0
      %p125 = por %p123, %p124
      %p126 = scmp.ne.s32.totalorder %s118, %s120
      %p127 = scmp.eq.s32.totalorder %s26, 1
      %p128 = por %p126, %p127
      %p129 = scmp.ne.s32.totalorder %s120, %s121
      %p130 = scmp.eq.s32.totalorder %s26, 0
      %p131 = por %p129, %p130
      %p132 = scmp.ne.s32.totalorder %s120, %s121
      %p133 = scmp.eq.s32.totalorder %s27, 1
      %p134 = por %p132, %p133
      %p136 = scmp.ne.s32.totalorder %s121, %s135
      %p137 = scmp.eq.s32.totalorder %s27, 0
      %p138 = por %p136, %p137
      %s140 = sadd.s32 %s139, 1
      %p143 = scmp.eq.s32.totalorder %s21, 1
      %p144 = scmp.ne.s32.totalorder %s139, %s141
      %p145 = scmp.eq.s32.totalorder %s21, 0
      %p146 = por %p144, %p145
      %p147 = scmp.ne.s32.totalorder %s139, %s141
      %p148 = scmp.eq.s32.totalorder %s26, 1
      %p149 = por %p147, %p148
      %p150 = scmp.ne.s32.totalorder %s141, %s142
      %p151 = scmp.eq.s32.totalorder %s26, 0
      %p152 = por %p150, %p151
      %p153 = scmp.ne.s32.totalorder %s141, %s142
      %p154 = scmp.eq.s32.totalorder %s27, 1
      %p155 = por %p153, %p154
      %p157 = scmp.ne.s32.totalorder %s142, %s156
      %p158 = scmp.eq.s32.totalorder %s27, 0
      %p159 = por %p157, %p158
      %s160 = ssub.s32 %s28, %s40
      %p161 = scmp.eq.s32.totalorder %s160, 0
      %s163 = sadd.s32 %s162, 1
      %s164 = scalar_select %p161, %s162, %s163
      %p167 = pneg %p161
      %p168 = scmp.eq.s32.totalorder %s21, 1
      %p169 = por %p167, %p168
      %p170 = scmp.ne.s32.totalorder %s162, %s165
      %p171 = scmp.eq.s32.totalorder %s21, 0
      %p172 = por %p170, %p171
      %p173 = scmp.ne.s32.totalorder %s162, %s165
      %p174 = scmp.eq.s32.totalorder %s26, 1
      %p175 = por %p173, %p174
      %p176 = scmp.ne.s32.totalorder %s165, %s166
      %p177 = scmp.eq.s32.totalorder %s26, 0
      %p178 = por %p176, %p177
      %p179 = scmp.ne.s32.totalorder %s165, %s166
      %p180 = scmp.eq.s32.totalorder %s27, 1
      %p181 = por %p179, %p180
      %p183 = scmp.ne.s32.totalorder %s166, %s182
      %p184 = scmp.eq.s32.totalorder %s27, 0
      %p185 = por %p183, %p184
      %p186 = scmp.le.s32.totalorder 1, %s21
      %p187 = scmp.lt.s32.totalorder %s21, 3
      %p188 = pnand %p186, %p187
      %p189 = pneg %p188
      // Predicated region
      $region9: #{tpu_custom_call.1} parent=5 // pred_check
        _
      $region10: #{tpu_custom_call.1} parent=5 // pred_check_branch
        %191 = sbr.rel (%p188) target = $region12
      $region11: #{tpu_custom_call.1} parent=5 // pred_region
        %s192 = ssub.s32 %s21, 1
        // Predicated region
        $region13: #{tpu_custom_call.1} parent=11 // pred_check
          %p193 = pneg %p110
        $region14: #{tpu_custom_call.1} parent=11 // pred_check_branch
          %195 = sbr.rel (%p193) target = $region16
        $region15: #{tpu_custom_call.1} parent=11 // pred_region
          %s197 = ssub.s32 256, 256
          %198 = vsyncadd [#allocation6], %s197
          %s199 = sshll.u32 [#allocation7], 4
          %s200 = int_to_ptr.vmem [resolvable:$true] %s199
          %205 = dma.hbm_to_vmem [thread:$0]  %s2, 256, %s200, [#allocation6], 64, 64, 4
        $region16: #{tpu_custom_call.1} parent=11 // pred_fallthru
          _
        // Predicated region
        $region17: #{tpu_custom_call.1} parent=11 // pred_check
          %p206 = pneg %p131
        $region18: #{tpu_custom_call.1} parent=11 // pred_check_branch
          %208 = sbr.rel (%p206) target = $region20
        $region19: #{tpu_custom_call.1} parent=11 // pred_region
          %s210 = ssub.s32 256, 256
          %211 = vsyncadd [#allocation9], %s210
          %s212 = sshll.u32 [#allocation8], 4
          %s213 = int_to_ptr.vmem [resolvable:$true] %s212
          %218 = dma.hbm_to_vmem [thread:$0]  %s3, 256, %s213, [#allocation9], 64, 64, 4
        $region20: #{tpu_custom_call.1} parent=11 // pred_fallthru
          _
        // Predicated region
        $region21: #{tpu_custom_call.1} parent=11 // pred_check
          %p219 = pneg %p152
        $region22: #{tpu_custom_call.1} parent=11 // pred_check_branch
          %221 = sbr.rel (%p219) target = $region24
        $region23: #{tpu_custom_call.1} parent=11 // pred_region
          %s223 = ssub.s32 16, 16
          %224 = vsyncadd [#allocation9], %s223
          %s226 = sshll.u32 [#allocation10], 4
          %s227 = int_to_ptr.vmem [resolvable:$true] %s226
          %229 = dma.hbm_to_vmem [thread:$0]  %s4, 16, %s227, [#allocation9]
        $region24: #{tpu_custom_call.1} parent=11 // pred_fallthru
          _
      $region12: #{tpu_custom_call.1} parent=5 // pred_fallthru
        _
      %p230 = scmp.lt.s32.totalorder %s21, 2
      // Predicated region
      $region25: #{tpu_custom_call.1} parent=5 // pred_check
        %p231 = pneg %p230
      $region26: #{tpu_custom_call.1} parent=5 // pred_check_branch
        %233 = sbr.rel (%p231) target = $region28
      $region27: #{tpu_custom_call.1} parent=5 // pred_region
        // Predicated region
        $region29: #{tpu_custom_call.1} parent=27 // pred_check
          %p234 = pneg %p55
        $region30: #{tpu_custom_call.1} parent=27 // pred_check_branch
          %236 = sbr.rel (%p234) target = $region32
        $region31: #{tpu_custom_call.1} parent=27 // pred_region
          %s237 = sand.u32 %s45, 1
          %s238 = scalar_lea.sflag [#allocation3], %s237
          %s239 = sand.u32 %s45, 1
          %s240 = smul.addr %s239, 16
          %s241 = scalar_lea.vmem [#allocation2], %s240
          %s243 = ssub.s32 256, 256
          %244 = vsyncadd %s238, %s243
          %s245 = sadd.s32 %s29, %s28
          %s246 = smul.addr %s245, 128
          %s247 = scalar_lea.hbm %s0, %s246
          %s248 = sshll.u32 %s241, 4
          %s249 = int_to_ptr.vmem [resolvable:$true] %s248
          %254 = dma.hbm_to_vmem [thread:$0]  %s247, 256, %s249, %s238, 256, 128, 8
        $region32: #{tpu_custom_call.1} parent=27 // pred_fallthru
          _
        // Predicated region
        $region33: #{tpu_custom_call.1} parent=27 // pred_check
          %p255 = pneg %p83
        $region34: #{tpu_custom_call.1} parent=27 // pred_check_branch
          %257 = sbr.rel (%p255) target = $region36
        $region35: #{tpu_custom_call.1} parent=27 // pred_region
          %s258 = sand.u32 %s21, 1
          %s259 = scalar_lea.sflag [#allocation6], %s258
          %s260 = sand.u32 %s73, 1
          %s261 = smul.addr %s260, 16
          %s262 = scalar_lea.vmem [#allocation5], %s261
          %s264 = ssub.s32 256, 256
          %265 = vsyncadd %s259, %s264
          %s266 = sadd.s32 %s29, %s28
          %s267 = smul.addr %s266, 128
          %s268 = scalar_lea.hbm %s1, %s267
          %s269 = sshll.u32 %s262, 4
          %s270 = int_to_ptr.vmem [resolvable:$true] %s269
          %275 = dma.hbm_to_vmem [thread:$0]  %s268, 256, %s270, %s259, 256, 128, 8
        $region36: #{tpu_custom_call.1} parent=27 // pred_fallthru
          _
      $region28: #{tpu_custom_call.1} parent=5 // pred_fallthru
        _
      %p276 = scmp.le.s32.totalorder 1, %s21
      %p277 = scmp.lt.s32.totalorder %s21, 3
      %p278 = pnand %p276, %p277
      %p279 = pneg %p278
      // Predicated region
      $region37: #{tpu_custom_call.1} parent=5 // pred_check
        _
      $region38: #{tpu_custom_call.1} parent=5 // pred_check_branch
        %281 = sbr.rel (%p278) target = $region40
      $region39: #{tpu_custom_call.1} parent=5 // pred_region
        %s282 = ssub.s32 %s21, 1
        %s283 = sand.u32 %s48, 1
        %s284 = scalar_lea.sflag [#allocation3], %s283
        %s285 = sand.u32 %s48, 1
        %s286 = smul.addr %s285, 16
        %s287 = scalar_lea.vmem [#allocation2], %s286
        // Predicated region
        $region41: #{tpu_custom_call.1} parent=39 // pred_check
          %p288 = pneg %p61
        $region42: #{tpu_custom_call.1} parent=39 // pred_check_branch
          %290 = sbr.rel (%p288) target = $region44
        $region43: #{tpu_custom_call.1} parent=39 // pred_region
          %291 = dma.done %s284, 256
        $region44: #{tpu_custom_call.1} parent=39 // pred_fallthru
          _
        %s292 = sand.u32 %s26, 1
        %s293 = scalar_lea.sflag [#allocation6], %s292
        %s294 = sand.u32 %s76, 1
        %s295 = smul.addr %s294, 16
        %s296 = scalar_lea.vmem [#allocation5], %s295
        // Predicated region
        $region45: #{tpu_custom_call.1} parent=39 // pred_check
          %p297 = pneg %p89
        $region46: #{tpu_custom_call.1} parent=39 // pred_check_branch
          %299 = sbr.rel (%p297) target = $region48
        $region47: #{tpu_custom_call.1} parent=39 // pred_region
          %300 = dma.done %s293, 256
        $region48: #{tpu_custom_call.1} parent=39 // pred_fallthru
          _
        // Predicated region
        $region49: #{tpu_custom_call.1} parent=39 // pred_check
          %p301 = pneg %p110
        $region50: #{tpu_custom_call.1} parent=39 // pred_check_branch
          %303 = sbr.rel (%p301) target = $region52
        $region51: #{tpu_custom_call.1} parent=39 // pred_region
          %304 = dma.done [#allocation6], 256
        $region52: #{tpu_custom_call.1} parent=39 // pred_fallthru
          _
        // Predicated region
        $region53: #{tpu_custom_call.1} parent=39 // pred_check
          %p305 = pneg %p131
        $region54: #{tpu_custom_call.1} parent=39 // pred_check_branch
          %307 = sbr.rel (%p305) target = $region56
        $region55: #{tpu_custom_call.1} parent=39 // pred_region
          %308 = dma.done [#allocation9], 256
        $region56: #{tpu_custom_call.1} parent=39 // pred_fallthru
          _
        // Predicated region
        $region57: #{tpu_custom_call.1} parent=39 // pred_check
          %p309 = pneg %p152
        $region58: #{tpu_custom_call.1} parent=39 // pred_check_branch
          %311 = sbr.rel (%p309) target = $region60
        $region59: #{tpu_custom_call.1} parent=39 // pred_region
          %312 = dma.done [#allocation9], 16
        $region60: #{tpu_custom_call.1} parent=39 // pred_fallthru
          _
        %s313 = sand.u32 %s48, 1
        %s314 = scalar_lea.sflag [#allocation3], %s313
        %s315 = sand.u32 %s48, 1
        %s316 = smul.addr %s315, 16
        %s317 = scalar_lea.vmem [#allocation2], %s316
        %p318 = pneg %p61
        %p319 = pneg %p58
        %s320 = sand.u32 %s26, 1
        %s321 = scalar_lea.sflag [#allocation6], %s320
        %s322 = sand.u32 %s76, 1
        %s323 = smul.addr %s322, 16
        %s324 = scalar_lea.vmem [#allocation5], %s323
        %p325 = pneg %p89
        %p326 = pneg %p86
        %p327 = pneg %p110
        %p328 = pneg %p107
        %p329 = pneg %p131
        %p330 = pneg %p128
        %p331 = pneg %p152
        %p332 = pneg %p149
        %p333 = pneg %p178
        %p334 = pneg %p175
        %s335 = sand.u32 %s165, 1
        %s336 = scalar_lea.sflag [#allocation4], %s335
        %s337 = sand.u32 %s165, 1
        %s338 = scalar_lea.vmem [#allocation11], %s337
        %v340 = vld [vmem:[%s287] sm:$0xff]
        %s341 = scalar_lea.vmem %s287, 8 [#allocation2]
        %v342 = vld [vmem:[%s341] sm:$0xff]
        %v343 = vld [vmem:[%s296] sm:$0xff]
        %s344 = scalar_lea.vmem %s296, 8 [#allocation5]
        %v345 = vld [vmem:[%s344] sm:$0xff]
        %v346 = vld [vmem:[#allocation7] sm:$0xf]
        %v347 = vld [vmem:[#allocation7 + $0x4] sm:$0xf]
        %v348 = vld [vmem:[#allocation7 + $0x8] sm:$0xf]
        %v349 = vld [vmem:[#allocation7 + $0xc] sm:$0xf]
        %v350 = vld [vmem:[#allocation8] sm:$0xf]
        %v351 = vld [vmem:[#allocation8 + $0x4] sm:$0xf]
        %v352 = vld [vmem:[#allocation8 + $0x8] sm:$0xf]
        %v353 = vld [vmem:[#allocation8 + $0xc] sm:$0xf]
        %v354 = vld [vmem:[#allocation10] sm:$0x1]
        %v355 = vsub.f32 %v340, %v342
        %v356 = vsub.f32 %v343, %v345
        %v357 = vmul.f32 %v340, %v342
        %v358 = vmul.f32 %v343, %v345
        %v359 = vpack.c.bf16 %v356, %v355
        %v360 = vpack.c.bf16 %v358, %v357
        %v365 = vunpack.c.l.b16 %v350
        %v366 = vunpack.c.l.b16 %v351
        %v367 = vunpack.c.l.b16 %v352
        %v368 = vunpack.c.l.b16 %v353
        %v369 = vpack.c.b16 %v366, %v365
        %v370 = vpack.c.b16 %v368, %v367
        %vm373 = vcmask 261120
        %v375 = vsel %vm373, %v360, 0
        %377 = vmatprep.subr.bf16.mxu0 0
        %378 = vmatpush1.bf16.msra.mxu0 %v369
        %379 = vmatprep.subr.bf16.mxu0 0
        %380 = vmatpush1.bf16.msra.mxu0 %v370
        %381 = vmatprep.subr.bf16.mxu0 0
        %382 = vmatpush1.bf16.msra.mxu0 0
        %383 = vmatprep.subr.bf16.mxu0 0
        %384 = vmatpush1.bf16.msra.mxu0 0
        %385 = vmatprep.subr.bf16.mxu0 0
        %386 = vmatpush1.bf16.msra.mxu0 0
        %387 = vmatprep.subr.bf16.mxu0 0
        %388 = vmatpush1.bf16.msra.mxu0 0
        %389 = vmatprep.subr.bf16.mxu0 0
        %390 = vmatpush1.bf16.msra.mxu0 0
        %391 = vmatprep.subr.bf16.mxu0 0
        %392 = vmatpush1.bf16.msra.mxu0 0
        %393 = vmatprep.subr.bf16.mxu0 0
        %394 = vmatpush1.bf16.msra.mxu0 0
        %395 = vmatprep.subr.bf16.mxu0 0
        %396 = vmatpush1.bf16.msra.mxu0 0
        %397 = vmatprep.subr.bf16.mxu0 0
        %398 = vmatpush1.bf16.msra.mxu0 0
        %399 = vmatprep.subr.bf16.mxu0 0
        %400 = vmatpush1.bf16.msra.mxu0 0
        %401 = vmatprep.subr.bf16.mxu0 0
        %402 = vmatpush1.bf16.msra.mxu0 0
        %403 = vmatprep.subr.bf16.mxu0 0
        %404 = vmatpush1.bf16.msra.mxu0 0
        %405 = vmatprep.subr.bf16.mxu0 0
        %406 = vmatpush1.bf16.msra.mxu0 0
        %407 = vmatprep.subr.bf16.mxu0 0
        %408 = vmatpush1.bf16.msra.mxu0 0
        %409 = vmatprep.mubr.bf16.mxu0 0
        %410 = vmatmul.mubr.bf16.gmra.mrb[0].mxu0 %v375
        %v411 = vpop.f32.mrb[0].mxu0
        %v412 = vadd.f32 0.0, %v411
        %v413 = vpop.f32.mrb[0].mxu0
        %v414 = vpop.f32.mrb[0].mxu0
        %v415 = vadd.f32 0.0, %v414
        %v416 = vpop.f32.mrb[0].mxu0
        %417 = vdwg.mxu0
        %v422 = vunpack.c.l.b16 %v346
        %v423 = vunpack.c.l.b16 %v347
        %v424 = vunpack.c.l.b16 %v348
        %v425 = vunpack.c.l.b16 %v349
        %v426 = vpack.c.b16 %v423, %v422
        %v427 = vpack.c.b16 %v425, %v424
        %v431 = vsel %vm373, %v359, 0
        %433 = vmatprep.subr.bf16.mxu0 0
        %434 = vmatpush1.bf16.msra.mxu0 %v426
        %435 = vmatprep.subr.bf16.mxu0 0
        %436 = vmatpush1.bf16.msra.mxu0 %v427
        %437 = vmatprep.subr.bf16.mxu0 0
        %438 = vmatpush1.bf16.msra.mxu0 0
        %439 = vmatprep.subr.bf16.mxu0 0
        %440 = vmatpush1.bf16.msra.mxu0 0
        %441 = vmatprep.subr.bf16.mxu0 0
        %442 = vmatpush1.bf16.msra.mxu0 0
        %443 = vmatprep.subr.bf16.mxu0 0
        %444 = vmatpush1.bf16.msra.mxu0 0
        %445 = vmatprep.subr.bf16.mxu0 0
        %446 = vmatpush1.bf16.msra.mxu0 0
        %447 = vmatprep.subr.bf16.mxu0 0
        %448 = vmatpush1.bf16.msra.mxu0 0
        %449 = vmatprep.subr.bf16.mxu0 0
        %450 = vmatpush1.bf16.msra.mxu0 0
        %451 = vmatprep.subr.bf16.mxu0 0
        %452 = vmatpush1.bf16.msra.mxu0 0
        %453 = vmatprep.subr.bf16.mxu0 0
        %454 = vmatpush1.bf16.msra.mxu0 0
        %455 = vmatprep.subr.bf16.mxu0 0
        %456 = vmatpush1.bf16.msra.mxu0 0
        %457 = vmatprep.subr.bf16.mxu0 0
        %458 = vmatpush1.bf16.msra.mxu0 0
        %459 = vmatprep.subr.bf16.mxu0 0
        %460 = vmatpush1.bf16.msra.mxu0 0
        %461 = vmatprep.subr.bf16.mxu0 0
        %462 = vmatpush1.bf16.msra.mxu0 0
        %463 = vmatprep.subr.bf16.mxu0 0
        %464 = vmatpush1.bf16.msra.mxu0 0
        %465 = vmatprep.mubr.bf16.mxu0 0
        %466 = vmatmul.mubr.bf16.gmra.mrb[0].mxu0 %v431
        %v467 = vpop.f32.mrb[0].mxu0
        %v468 = vadd.f32 %v412, %v467
        %v469 = vpop.f32.mrb[0].mxu0
        %v470 = vpop.f32.mrb[0].mxu0
        %v471 = vadd.f32 %v415, %v470
        %v472 = vpop.f32.mrb[0].mxu0
        %473 = vdwg.mxu0
        %v475 = vlaneseq
        %v476 = vshrl.u32 %v475, 7
        %v477 = vsub.s32 0, %v476
        %v478 = vrot.slane %v354, %v477
        %v480 = vadd.f32 %v468, %v478
        %v481 = vadd.f32 %v471, %v478
        %v482 = vmax.f32 %v480, 0.0
        %v483 = vmax.f32 %v481, 0.0
        %v484 = vpack.c.bf16 %v483, %v482
        %v486 = vrot.slane %v484, 4
        %v488 = vsel %vm373, %v486, 0
        %490 = vmatprep.subr.bf16.mxu0 0
        %491 = vmatpush1.bf16.msra.mxu0 %v369
        %492 = vmatprep.subr.bf16.mxu0 0
        %493 = vmatpush1.bf16.msra.mxu0 %v370
        %494 = vmatprep.subr.bf16.mxu0 0
        %495 = vmatpush1.bf16.msra.mxu0 0
        %496 = vmatprep.subr.bf16.mxu0 0
        %497 = vmatpush1.bf16.msra.mxu0 0
        %498 = vmatprep.subr.bf16.mxu0 0
        %499 = vmatpush1.bf16.msra.mxu0 0
        %500 = vmatprep.subr.bf16.mxu0 0
        %501 = vmatpush1.bf16.msra.mxu0 0
        %502 = vmatprep.subr.bf16.mxu0 0
        %503 = vmatpush1.bf16.msra.mxu0 0
        %504 = vmatprep.subr.bf16.mxu0 0
        %505 = vmatpush1.bf16.msra.mxu0 0
        %506 = vmatprep.subr.bf16.mxu0 0
        %507 = vmatpush1.bf16.msra.mxu0 0
        %508 = vmatprep.subr.bf16.mxu0 0
        %509 = vmatpush1.bf16.msra.mxu0 0
        %510 = vmatprep.subr.bf16.mxu0 0
        %511 = vmatpush1.bf16.msra.mxu0 0
        %512 = vmatprep.subr.bf16.mxu0 0
        %513 = vmatpush1.bf16.msra.mxu0 0
        %514 = vmatprep.subr.bf16.mxu0 0
        %515 = vmatpush1.bf16.msra.mxu0 0
        %516 = vmatprep.subr.bf16.mxu0 0
        %517 = vmatpush1.bf16.msra.mxu0 0
        %518 = vmatprep.subr.bf16.mxu0 0
        %519 = vmatpush1.bf16.msra.mxu0 0
        %520 = vmatprep.subr.bf16.mxu0 0
        %521 = vmatpush1.bf16.msra.mxu0 0
        %522 = vmatprep.mubr.bf16.mxu0 0
        %523 = vmatmul.mubr.bf16.gmra.mrb[0].mxu0 %v488
        %v524 = vpop.f32.mrb[0].mxu0
        %v525 = vadd.f32 0.0, %v524
        %v526 = vpop.f32.mrb[0].mxu0
        %v527 = vpop.f32.mrb[0].mxu0
        %v528 = vpop.f32.mrb[0].mxu0
        %529 = vdwg.mxu0
        %v531 = vsel %vm373, %v484, 0
        %533 = vmatprep.subr.bf16.mxu0 0
        %534 = vmatpush1.bf16.msra.mxu0 %v426
        %535 = vmatprep.subr.bf16.mxu0 0
        %536 = vmatpush1.bf16.msra.mxu0 %v427
        %537 = vmatprep.subr.bf16.mxu0 0
        %538 = vmatpush1.bf16.msra.mxu0 0
        %539 = vmatprep.subr.bf16.mxu0 0
        %540 = vmatpush1.bf16.msra.mxu0 0
        %541 = vmatprep.subr.bf16.mxu0 0
        %542 = vmatpush1.bf16.msra.mxu0 0
        %543 = vmatprep.subr.bf16.mxu0 0
        %544 = vmatpush1.bf16.msra.mxu0 0
        %545 = vmatprep.subr.bf16.mxu0 0
        %546 = vmatpush1.bf16.msra.mxu0 0
        %547 = vmatprep.subr.bf16.mxu0 0
        %548 = vmatpush1.bf16.msra.mxu0 0
        %549 = vmatprep.subr.bf16.mxu0 0
        %550 = vmatpush1.bf16.msra.mxu0 0
        %551 = vmatprep.subr.bf16.mxu0 0
        %552 = vmatpush1.bf16.msra.mxu0 0
        %553 = vmatprep.subr.bf16.mxu0 0
        %554 = vmatpush1.bf16.msra.mxu0 0
        %555 = vmatprep.subr.bf16.mxu0 0
        %556 = vmatpush1.bf16.msra.mxu0 0
        %557 = vmatprep.subr.bf16.mxu0 0
        %558 = vmatpush1.bf16.msra.mxu0 0
        %559 = vmatprep.subr.bf16.mxu0 0
        %560 = vmatpush1.bf16.msra.mxu0 0
        %561 = vmatprep.subr.bf16.mxu0 0
        %562 = vmatpush1.bf16.msra.mxu0 0
        %563 = vmatprep.subr.bf16.mxu0 0
        %564 = vmatpush1.bf16.msra.mxu0 0
        %565 = vmatprep.mubr.bf16.mxu0 0
        %566 = vmatmul.mubr.bf16.gmra.mrb[0].mxu0 %v531
        %v567 = vpop.f32.mrb[0].mxu0
        %v568 = vadd.f32 %v525, %v567
        %v569 = vpop.f32.mrb[0].mxu0
        %v570 = vpop.f32.mrb[0].mxu0
        %v571 = vpop.f32.mrb[0].mxu0
        %572 = vdwg.mxu0
        %v573 = vsel %vm373, %v568, -inf
        %v574 = vrot.slane %v573, 4
        %v575 = vmax.f32 %v573, %v574
        %v576 = vrot.slane %v575, 2
        %v577 = vmax.f32 %v575, %v576
        %v578 = vrot.slane %v577, 1
        %v579 = vmax.f32 %v577, %v578
        %p580 = scmp.eq.s32.totalorder %s31, 0
        // Predicated region
        $region61: #{tpu_custom_call.1} parent=39 // pred_check
          %p581 = pneg %p580
        $region62: #{tpu_custom_call.1} parent=39 // pred_check_branch
          %583 = sbr.rel (%p581) target = $region64
        $region63: #{tpu_custom_call.1} parent=39 // pred_region
          %vm584 = vcmask 253952
          %585 = vst.msk [vmem:[%s338] sm:$0x1] %vm584, %v579
        $region64: #{tpu_custom_call.1} parent=39 // pred_fallthru
          _
        %p586 = scmp.ne.s32.totalorder %s31, 0
        // Predicated region
        $region65: #{tpu_custom_call.1} parent=39 // pred_check
          %p587 = pneg %p586
        $region66: #{tpu_custom_call.1} parent=39 // pred_check_branch
          %589 = sbr.rel (%p587) target = $region68
        $region67: #{tpu_custom_call.1} parent=39 // pred_region
          %v590 = vld [vmem:[%s338] sm:$0x1]
          %v591 = vmax.f32 %v590, %v579
          %vm592 = vcmask 253952
          %593 = vst.msk [vmem:[%s338] sm:$0x1] %vm592, %v591
        $region68: #{tpu_custom_call.1} parent=39 // pred_fallthru
          _
        // Predicated region
        $region69: #{tpu_custom_call.1} parent=39 // pred_check
          %p594 = pneg %p580
        $region70: #{tpu_custom_call.1} parent=39 // pred_check_branch
          %596 = sbr.rel (%p594) target = $region72
        $region71: #{tpu_custom_call.1} parent=39 // pred_region
          %v597 = vld [vmem:[%s338] sm:$0x1]
          %v598 = vadd.f32 %v597, %v354
          %vm599 = vcmask 253952
          %600 = vst.msk [vmem:[%s338] sm:$0x1] %vm599, %v598
        $region72: #{tpu_custom_call.1} parent=39 // pred_fallthru
          _
        %s601 = sand.u32 %s165, 1
        %s602 = scalar_lea.sflag [#allocation4], %s601
        %s603 = sand.u32 %s165, 1
        %s604 = scalar_lea.vmem [#allocation11], %s603
        // Predicated region
        $region73: #{tpu_custom_call.1} parent=39 // pred_check
          %p605 = pneg %p175
        $region74: #{tpu_custom_call.1} parent=39 // pred_check_branch
          %607 = sbr.rel (%p605) target = $region76
        $region75: #{tpu_custom_call.1} parent=39 // pred_region
          %s609 = ssub.s32 16, 16
          %610 = vsyncadd %s602, %s609
          %s611 = smul.addr %s30, 16
          %s612 = scalar_lea.hbm %s5, %s611
          %s614 = sshll.u32 %s604, 4
          %s615 = int_to_ptr.vmem [resolvable:$true] %s614
          %617 = dma.vmem_to_hbm [thread:$0]  %s615, 16, %s612, %s602
        $region76: #{tpu_custom_call.1} parent=39 // pred_fallthru
          _
      $region40: #{tpu_custom_call.1} parent=5 // pred_fallthru
        _
      %p618 = scmp.le.s32.totalorder 2, %s21
      // Predicated region
      $region77: #{tpu_custom_call.1} parent=5 // pred_check
        %p619 = pneg %p618
      $region78: #{tpu_custom_call.1} parent=5 // pred_check_branch
        %621 = sbr.rel (%p619) target = $region80
      $region79: #{tpu_custom_call.1} parent=5 // pred_region
        %s622 = ssub.s32 %s21, 2
        // Predicated region
        $region81: #{tpu_custom_call.1} parent=79 // pred_check
          %p623 = pneg %p181
        $region82: #{tpu_custom_call.1} parent=79 // pred_check_branch
          %625 = sbr.rel (%p623) target = $region84
        $region83: #{tpu_custom_call.1} parent=79 // pred_region
          %s626 = sand.u32 %s166, 1
          %s627 = scalar_lea.sflag [#allocation4], %s626
          %s628 = sand.u32 %s166, 1
          %s629 = scalar_lea.vmem [#allocation11], %s628
          %630 = dma.done %s627, 16
        $region84: #{tpu_custom_call.1} parent=79 // pred_fallthru
          _
      $region80: #{tpu_custom_call.1} parent=5 // pred_fallthru
        _
    $region6: #{tpu_custom_call.1} parent=1 // loop_footer
      %s25 = sadd.s32 1, %s21
    $region7: #{tpu_custom_call.1} parent=1 // loop_footer_branch
      %20 = sbr.rel target = $region3
    $region8: #{tpu_custom_call.1} parent=1 // loop_exit
      _
    %631 = vsyncpa [#allocation3], 1
    %s632 = scalar_lea.sflag [#allocation3], 1
    %633 = vsyncpa %s632, 1
    %634 = vsyncpa [#allocation6], 1
    %s635 = scalar_lea.sflag [#allocation6], 1
    %636 = vsyncpa %s635, 1
    %637 = vsyncpa [#allocation9], 1
    %638 = vsyncpa [#allocation4], 1
    %s639 = scalar_lea.sflag [#allocation4], 1
    %640 = vsyncpa %s639, 1

</llo_original>
